<compile_context>
chip_gen: v7x
topology: tpu7x:2x2x1
jax: 0.10.0
libtpu: 0.0.40
codegen_flags: <defaults>
</compile_context>

<pallas_src>
import functools

import jax
import jax.numpy as jnp
from jax import lax
from jax.experimental import pallas as pl
from jax.experimental.pallas import tpu as pltpu

BN_EPS = 1e-5
LRELU_SLOPE = 0.01          # PyTorch nn.LeakyReLU default negative_slope
LANE = 128
KSIZE = 4
STRIDE = 2
PAD = 1


def _round_up(x, m):
    return (x + m - 1) // m * m


def _pick_tile_m(m_rows, target=1024):
    """Largest multiple-of-8 row tile <= target that divides m_rows, else one tile."""
    if m_rows <= target:
        return m_rows
    t = target - target % 8
    while t >= 8:
        if m_rows % t == 0:
            return t
        t -= 8
    # TODO(synk): replace with pl.cdiv grid + masked last tile for awkward M.
    return m_rows


def _vmem_limit_bytes():
    try:
        cap = pltpu.get_tpu_info().vmem_capacity_bytes  # 128 MiB v5e/v6e, 64 MiB v7x
        return int(min(cap * 3 // 4, 96 * 1024 * 1024))
    except Exception:
        return 32 * 1024 * 1024


_VMEM_LIMIT = _vmem_limit_bytes()


# --------------------------------------------------------------------------------------
# Kernels
# --------------------------------------------------------------------------------------
def _conv_bn_act_kernel(p_ref, w1_ref, w2_ref, g1_ref, be1_ref, g2_ref, be2_ref,
                        h_ref, h2_ref, h0a, h0b, ss):
    """Fused two-branch conv GEMM + BatchNorm (batch stats) + LeakyReLU.

    Grid = (phase, row_tile), both "arbitrary" (sequential).
      phase 0: GEMM the patch tile against both conv weights; stash pre-BN activations
               in VMEM scratch (h0a / h0b), channel-compact (no lane padding).
      phase 1: at m==0 compute per-channel mean/var (two-pass over the full scratch)
               and store scale/shift; then per tile apply the BN affine + LeakyReLU and
               stream h (branch 1, f32) and h2 (branch 2, matmul dtype) to HBM.
    """
    ph = pl.program_id(0)
    m = pl.program_id(1)
    tile_m = p_ref.shape[0]
    row0 = pl.multiple_of(m * tile_m, 8)

    @pl.when(ph == 0)
    def _conv():
        p = p_ref[...]
        h0a[pl.ds(row0, tile_m), :] = jnp.dot(
            p, w1_ref[...], preferred_element_type=jnp.float32)
        h0b[pl.ds(row0, tile_m), :] = jnp.dot(
            p, w2_ref[...], preferred_element_type=jnp.float32)

    @pl.when(ph == 1)
    def _normalize():
        @pl.when(m == 0)
        def _stats():
            def scale_shift(h0_ref, g_ref, be_ref):
                h0 = h0_ref[...]                               # (M, C) f32 in VMEM
                mean = jnp.mean(h0, axis=0, keepdims=True)
                var = jnp.mean((h0 - mean) ** 2, axis=0, keepdims=True)  # two-pass
                scale = g_ref[...] * lax.rsqrt(var + BN_EPS)
                return scale, be_ref[...] - mean * scale

            s1, t1 = scale_shift(h0a, g1_ref, be1_ref)
            s2, t2 = scale_shift(h0b, g2_ref, be2_ref)
            ss[0:1, :] = s1
            ss[1:2, :] = t1
            ss[2:3, :] = s2
            ss[3:4, :] = t2

        ya = h0a[pl.ds(row0, tile_m), :] * ss[0:1, :] + ss[1:2, :]
        yb = h0b[pl.ds(row0, tile_m), :] * ss[2:3, :] + ss[3:4, :]
        h_ref[...] = jnp.maximum(ya, LRELU_SLOPE * ya)          # LeakyReLU
        h2_ref[...] = jnp.maximum(yb, LRELU_SLOPE * yb).astype(h2_ref.dtype)


def _dual_fc_kernel(h2_ref, w_ref, b_ref, z_ref):
    """Both fc heads as one matmul: (B, P*C) @ (P*C, 2*Z) + bias."""
    z_ref[...] = jnp.dot(h2_ref[...].astype(w_ref.dtype), w_ref[...],
                         preferred_element_type=jnp.float32) + b_ref[...]


# --------------------------------------------------------------------------------------
# Wrapper
# --------------------------------------------------------------------------------------
@functools.partial(jax.jit, static_argnames=("use_bf16",))
def cnn_encode_layer(x, wc1, bc1, g1, be1, wc2, bc2, g2, be2,
                     wf1, bfc1, wf2, bfc2, *, use_bf16=True):
    # NOTE: bc1/bc2 (conv biases) are accepted for interface parity but intentionally
    # unused: a per-channel constant added before BatchNorm is cancelled by the mean.
    del bc1, bc2

    B, C_in, H, W = x.shape
    assert H % 2 == 0 and W % 2 == 0
    C_out = wc1.shape[0]
    Z = wf1.shape[0]
    OH, OW = H // STRIDE, W // STRIDE
    P = OH * OW
    M = B * P

    K_raw = KSIZE * KSIZE * C_in
    K_pad = _round_up(K_raw, LANE)
    mm_dtype = jnp.bfloat16 if use_bf16 else jnp.float32
    itemsize = 2 if use_bf16 else 4

    scratch_bytes = 2 * M * C_out * 4
    if scratch_bytes > _VMEM_LIMIT // 2:
        # TODO(synk): fall back to the split conv-stats / normalize kernels for large M.
        raise NotImplementedError("pre-BN activations too large for VMEM-resident fusion")

    # ---- im2col patches (layout plumbing only; all FLOPs live in the kernels) --------
    xp = jnp.pad(x, ((0, 0), (0, 0), (PAD, PAD), (PAD, PAD)))
    x_nhwc = jnp.transpose(xp, (0, 2, 3, 1))                        # (B, H+2, W+2, C_in)
    cols = [x_nhwc[:, kh:kh + STRIDE * OH:STRIDE, kw:kw + STRIDE * OW:STRIDE, :]
            for kh in range(KSIZE) for kw in range(KSIZE)]
    patches = jnp.concatenate(cols, axis=-1).reshape(M, K_raw)      # col=(kh*4+kw)*C_in+ci
    patches = jnp.pad(patches, ((0, 0), (0, K_pad - K_raw))).astype(mm_dtype)

    # ---- repack conv weights: (C_out, C_in, 4, 4) -> (K_pad, C_out), channel-compact --
    def conv_w(wc):
        wm = jnp.transpose(wc, (2, 3, 1, 0)).reshape(K_raw, C_out)
        return jnp.pad(wm, ((0, K_pad - K_raw), (0, 0))).astype(mm_dtype)

    w1 = conv_w(wc1)
    w2 = conv_w(wc2)
    g1r = g1.reshape(1, C_out).astype(jnp.float32)
    be1r = be1.reshape(1, C_out).astype(jnp.float32)
    g2r = g2.reshape(1, C_out).astype(jnp.float32)
    be2r = be2.reshape(1, C_out).astype(jnp.float32)

    tile_m = _pick_tile_m(M)
    n_m = M // tile_m

    cost1 = pl.CostEstimate(
        flops=int(4 * M * K_pad * C_out + 12 * M * C_out),
        transcendentals=0,
        bytes_accessed=int(M * K_pad * itemsize + 2 * K_pad * C_out * itemsize
                           + 4 * C_out * 4 + M * C_out * 4 + M * C_out * itemsize))

    h_act, h2_act = pl.pallas_call(
        _conv_bn_act_kernel,
        out_shape=(jax.ShapeDtypeStruct((M, C_out), jnp.float32),
                   jax.ShapeDtypeStruct((M, C_out), mm_dtype)),
        grid=(2, n_m),
        in_specs=[
            # patches only needed in phase 0; pin to block 0 in phase 1 (no re-DMA)
            pl.BlockSpec((tile_m, K_pad), lambda ph, m: (m * (1 - ph), 0)),
            pl.BlockSpec((K_pad, C_out), lambda ph, m: (0, 0)),
            pl.BlockSpec((K_pad, C_out), lambda ph, m: (0, 0)),
            pl.BlockSpec((1, C_out), lambda ph, m: (0, 0)),
            pl.BlockSpec((1, C_out), lambda ph, m: (0, 0)),
            pl.BlockSpec((1, C_out), lambda ph, m: (0, 0)),
            pl.BlockSpec((1, C_out), lambda ph, m: (0, 0)),
        ],
        out_specs=(
            # outputs only written in phase 1; park on block 0 during phase 0
            pl.BlockSpec((tile_m, C_out), lambda ph, m: (m * ph, 0)),
            pl.BlockSpec((tile_m, C_out), lambda ph, m: (m * ph, 0)),
        ),
        scratch_shapes=[pltpu.VMEM((M, C_out), jnp.float32),
                        pltpu.VMEM((M, C_out), jnp.float32),
                        pltpu.VMEM((4, C_out), jnp.float32)],
        compiler_params=pltpu.CompilerParams(
            # phase axis and scratch-carried stats force sequential execution.
            dimension_semantics=("arbitrary", "arbitrary"),
            vmem_limit_bytes=_VMEM_LIMIT),
        cost_estimate=cost1,
    )(patches, w1, w2, g1r, be1r, g2r, be2r)

    # branch-1 output back to NCHW (small, channel-compact; no padded-lane slicing)
    h = h_act.reshape(B, OH, OW, C_out).transpose(0, 3, 1, 2)

    # ---- dual fc heads on branch 2 ----------------------------------------------------
    # h2_act is (B*P, C_out) row-major, so this reshape is a free layout no-op.
    h2_flat = h2_act.reshape(B, P * C_out)

    def fc_w(wf):   # torch (Z, C_out*P), col = c*P + p  ->  (P*C_out, Z), row = p*C_out + c
        wt = jnp.transpose(wf.reshape(Z, C_out, P), (2, 1, 0))      # (P, C_out, Z)
        return wt.reshape(P * C_out, Z)

    wfc_both = jnp.concatenate([fc_w(wf1), fc_w(wf2)], axis=1).astype(mm_dtype)
    bfc_both = jnp.concatenate([bfc1, bfc2]).reshape(1, 2 * Z).astype(jnp.float32)

    cost2 = pl.CostEstimate(
        flops=int(4 * B * P * C_out * Z),
        transcendentals=0,
        bytes_accessed=int(B * P * C_out * itemsize + P * C_out * 2 * Z * itemsize
                           + 2 * Z * 4 + B * 2 * Z * 4))

    vmem = pl.BlockSpec(memory_space=pltpu.MemorySpace.VMEM)
    z_both = pl.pallas_call(
        _dual_fc_kernel,
        out_shape=jax.ShapeDtypeStruct((B, 2 * Z), jnp.float32),
        in_specs=[vmem, vmem, vmem],
        out_specs=vmem,
        compiler_params=pltpu.CompilerParams(vmem_limit_bytes=_VMEM_LIMIT),
        cost_estimate=cost2,
    )(h2_flat, wfc_both, bfc_both)

    z1 = z_both[:, :Z]
    z2 = z_both[:, Z:]
    return h, z1, z2


# --------------------------------------------------------------------------------------
# Pure-JAX reference (PyTorch training-mode semantics)
# --------------------------------------------------------------------------------------
def _reference(x, wc1, bc1, g1, be1, wc2, bc2, g2, be2, wf1, bfc1, wf2, bfc2):
    def branch(wc, bc, g, be):
        y = lax.conv_general_dilated(
            x, wc, window_strides=(STRIDE, STRIDE),
            padding=((PAD, PAD), (PAD, PAD)),
            dimension_numbers=("NCHW", "OIHW", "NCHW"))
        y = y + bc[None, :, None, None]
        mean = jnp.mean(y, axis=(0, 2, 3), keepdims=True)
        var = jnp.mean((y - mean) ** 2, axis=(0, 2, 3), keepdims=True)
        yn = (y - mean) / jnp.sqrt(var + BN_EPS)
        yn = yn * g[None, :, None, None] + be[None, :, None, None]
        return jnp.where(yn >= 0, yn, LRELU_SLOPE * yn)

    h = branch(wc1, bc1, g1, be1)
    h2 = branch(wc2, bc2, g2, be2)
    h2f = h2.reshape(h2.shape[0], -1)
    return h, h2f @ wf1.T + bfc1, h2f @ wf2.T + bfc2


def _uniform(key, shape, bound):
    return jax.random.uniform(key, shape, jnp.float32, -bound, bound)


if __name__ == "__main__":
    # Small shapes consistent with the module: Conv2d(C_in->C_out, 4, s=2, p=1),
    # out_img_dims = (8, 8), fc input = C_out*8*8.
    B, C_IN, H, W = 2, 4, 16, 16
    C_OUT, ZDIM = 8, 16
    OH, OW = H // 2, W // 2

    key = jax.random.PRNGKey(0)
    ks = jax.random.split(key, 13)
    x = jax.random.normal(ks[0], (B, C_IN, H, W), jnp.float32)

    conv_bound = 1.0 / (C_IN * KSIZE * KSIZE) ** 0.5
    fc_bound = 1.0 / (C_OUT * OH * OW) ** 0.5

    wc1 = _uniform(ks[1], (C_OUT, C_IN, KSIZE, KSIZE), conv_bound)
    bc1 = _uniform(ks[2], (C_OUT,), conv_bound)
    wc2 = _uniform(ks[3], (C_OUT, C_IN, KSIZE, KSIZE), conv_bound)
    bc2 = _uniform(ks[4], (C_OUT,), conv_bound)
    g1 = 1.0 + 0.1 * jax.random.normal(ks[9], (C_OUT,), jnp.float32)
    be1 = 0.1 * jax.random.normal(ks[10], (C_OUT,), jnp.float32)
    g2 = 1.0 + 0.1 * jax.random.normal(ks[11], (C_OUT,), jnp.float32)
    be2 = 0.1 * jax.random.normal(ks[12], (C_OUT,), jnp.float32)
    wf1 = _uniform(ks[5], (ZDIM, C_OUT * OH * OW), fc_bound)
    bfc1 = _uniform(ks[6], (ZDIM,), fc_bound)
    wf2 = _uniform(ks[7], (ZDIM, C_OUT * OH * OW), fc_bound)
    bfc2 = _uniform(ks[8], (ZDIM,), fc_bound)

    args = (x, wc1, bc1, g1, be1, wc2, bc2, g2, be2, wf1, bfc1, wf2, bfc2)
    h_r, z1_r, z2_r = _reference(*args)

    # Default perf path: bf16 MXU operands, f32 accumulation / BN math (loose check).
    h, z1, z2 = cnn_encode_layer(*args)
    jax.block_until_ready((h, z1, z2))
    assert h.shape == (B, C_OUT, OH, OW) and z1.shape == (B, ZDIM) and z2.shape == (B, ZDIM)
    assert jnp.allclose(h, h_r, atol=1e-1, rtol=1e-1)
    assert jnp.allclose(z1, z1_r, atol=1e-1, rtol=1e-1)
    assert jnp.allclose(z2, z2_r, atol=1e-1, rtol=1e-1)

    # f32 path: tighter parity check against the reference.
    h32, z1_32, z2_32 = cnn_encode_layer(*args, use_bf16=False)
    jax.block_until_ready((h32, z1_32, z2_32))
    assert jnp.allclose(h32, h_r, atol=2e-2, rtol=2e-2)
    assert jnp.allclose(z1_32, z1_r, atol=2e-2, rtol=2e-2)
    assert jnp.allclose(z2_32, z2_r, atol=2e-2, rtol=2e-2)

    print("KERNEL_OK")
</pallas_src>

<mosaic_0001>
module attributes {stable_mosaic.version = 11 : i64} {
  func.func @_conv_bn_act_kernel(%arg0: i32, %arg1: i32, %arg2: memref<128x128xbf16, #tpu.memory_space<vmem>>, %arg3: memref<128x8xbf16, #tpu.memory_space<vmem>>, %arg4: memref<128x8xbf16, #tpu.memory_space<vmem>>, %arg5: memref<1x8xf32, #tpu.memory_space<vmem>>, %arg6: memref<1x8xf32, #tpu.memory_space<vmem>>, %arg7: memref<1x8xf32, #tpu.memory_space<vmem>>, %arg8: memref<1x8xf32, #tpu.memory_space<vmem>>, %arg9: memref<128x8xf32, #tpu.memory_space<vmem>>, %arg10: memref<128x8xbf16, #tpu.memory_space<vmem>>, %arg11: memref<128x8xf32, #tpu.memory_space<vmem>>, %arg12: memref<128x8xf32, #tpu.memory_space<vmem>>, %arg13: memref<4x8xf32, #tpu.memory_space<vmem>>) attributes {dimension_semantics = [#tpu.dimension_semantics<arbitrary>, #tpu.dimension_semantics<arbitrary>], iteration_bounds = array<i64: 2, 1>, scalar_prefetch = 0 : i64, scratch_operands = 3 : i64, tpu.core_type = #tpu.core_type<tc>, window_params = [{transform_indices = @transform_0, window_bounds = array<i64: 128, 128>}, {pipeline_mode = #tpu.pipeline_mode<synchronous>, transform_indices = @transform_1, window_bounds = array<i64: 128, 8>}, {pipeline_mode = #tpu.pipeline_mode<synchronous>, transform_indices = @transform_2, window_bounds = array<i64: 128, 8>}, {pipeline_mode = #tpu.pipeline_mode<synchronous>, transform_indices = @transform_3, window_bounds = array<i64: 1, 8>}, {pipeline_mode = #tpu.pipeline_mode<synchronous>, transform_indices = @transform_4, window_bounds = array<i64: 1, 8>}, {pipeline_mode = #tpu.pipeline_mode<synchronous>, transform_indices = @transform_5, window_bounds = array<i64: 1, 8>}, {pipeline_mode = #tpu.pipeline_mode<synchronous>, transform_indices = @transform_6, window_bounds = array<i64: 1, 8>}, {transform_indices = @transform_7, window_bounds = array<i64: 128, 8>}, {transform_indices = @transform_8, window_bounds = array<i64: 128, 8>}]} {
    %c128_i32 = arith.constant 128 : i32
    %0 = arith.muli %arg1, %c128_i32 : i32
    %1 = tpu.assume_multiple %0, 8 : i32
    %c0_i32 = arith.constant 0 : i32
    %2 = arith.cmpi eq, %arg0, %c0_i32 : i32
    %3 = arith.extui %2 : i1 to i32
    %c0_i32_0 = arith.constant 0 : i32
    %4 = arith.cmpi ne, %3, %c0_i32_0 : i32
    scf.if %4 {
      %c0 = arith.constant 0 : index
      %c0_2 = arith.constant 0 : index
      %8 = vector.load %arg2[%c0, %c0_2] : memref<128x128xbf16, #tpu.memory_space<vmem>>, vector<128x128xbf16>
      %c0_3 = arith.constant 0 : index
      %c0_4 = arith.constant 0 : index
      %9 = vector.load %arg3[%c0_3, %c0_4] : memref<128x8xbf16, #tpu.memory_space<vmem>>, vector<128x8xbf16>
      %cst = arith.constant dense<0.000000e+00> : vector<128x8xf32>
      %10 = tpu.matmul %8, %9, %cst {dimension_numbers = #tpu.dot_dimension_numbers<[1], [0], [0], [1], [0, 0, 1, 1], [], []>} : vector<128x128xbf16>, vector<128x8xbf16>, vector<128x8xf32> -> vector<128x8xf32>
      %11 = arith.index_cast %1 : i32 to index
      %c0_5 = arith.constant 0 : index
      %12 = vector.load %arg11[%11, %c0_5] : memref<128x8xf32, #tpu.memory_space<vmem>>, vector<128x8xf32>
      tpu.vector_store %arg11[%11, %c0_5], %10 {strides = array<i32>} : memref<128x8xf32, #tpu.memory_space<vmem>>, vector<128x8xf32>,
      %c0_6 = arith.constant 0 : index
      %c0_7 = arith.constant 0 : index
      %13 = vector.load %arg4[%c0_6, %c0_7] : memref<128x8xbf16, #tpu.memory_space<vmem>>, vector<128x8xbf16>
      %cst_8 = arith.constant dense<0.000000e+00> : vector<128x8xf32>
      %14 = tpu.matmul %8, %13, %cst_8 {dimension_numbers = #tpu.dot_dimension_numbers<[1], [0], [0], [1], [0, 0, 1, 1], [], []>} : vector<128x128xbf16>, vector<128x8xbf16>, vector<128x8xf32> -> vector<128x8xf32>
      %15 = arith.index_cast %1 : i32 to index
      %c0_9 = arith.constant 0 : index
      %16 = vector.load %arg12[%15, %c0_9] : memref<128x8xf32, #tpu.memory_space<vmem>>, vector<128x8xf32>
      tpu.vector_store %arg12[%15, %c0_9], %14 {strides = array<i32>} : memref<128x8xf32, #tpu.memory_space<vmem>>, vector<128x8xf32>,
    } else {
    }
    %c1_i32 = arith.constant 1 : i32
    %5 = arith.cmpi eq, %arg0, %c1_i32 : i32
    %6 = arith.extui %5 : i1 to i32
    %c0_i32_1 = arith.constant 0 : i32
    %7 = arith.cmpi ne, %6, %c0_i32_1 : i32
    scf.if %7 {
      %c0_i32_2 = arith.constant 0 : i32
      %8 = arith.cmpi eq, %arg1, %c0_i32_2 : i32
      %9 = arith.extui %8 : i1 to i32
      %c0_i32_3 = arith.constant 0 : i32
      %10 = arith.cmpi ne, %9, %c0_i32_3 : i32
      scf.if %10 {
        %c0_15 = arith.constant 0 : index
        %c0_16 = arith.constant 0 : index
        %36 = vector.load %arg11[%c0_15, %c0_16] : memref<128x8xf32, #tpu.memory_space<vmem>>, vector<128x8xf32>
        %cst_17 = arith.constant dense<0.000000e+00> : vector<8xf32>
        %37 = vector.multi_reduction <add>, %36, %cst_17 [0] : vector<128x8xf32> to vector<8xf32>
        %38 = vector.shape_cast %37 : vector<8xf32> to vector<1x8xf32>
        %cst_18 = arith.constant 1.280000e+02 : f32
        %39 = vector.broadcast %cst_18 : f32 to vector<1x8xf32>
        %40 = arith.divf %38, %39 : vector<1x8xf32>
        %41 = vector.broadcast %40 : vector<1x8xf32> to vector<128x8xf32>
        %42 = arith.subf %36, %41 : vector<128x8xf32>
        %43 = arith.mulf %42, %42 : vector<128x8xf32>
        %cst_19 = arith.constant dense<0.000000e+00> : vector<8xf32>
        %44 = vector.multi_reduction <add>, %43, %cst_19 [0] : vector<128x8xf32> to vector<8xf32>
        %45 = vector.shape_cast %44 : vector<8xf32> to vector<1x8xf32>
        %cst_20 = arith.constant 1.280000e+02 : f32
        %46 = vector.broadcast %cst_20 : f32 to vector<1x8xf32>
        %47 = arith.divf %45, %46 : vector<1x8xf32>
        %c0_21 = arith.constant 0 : index
        %c0_22 = arith.constant 0 : index
        %48 = vector.load %arg5[%c0_21, %c0_22] : memref<1x8xf32, #tpu.memory_space<vmem>>, vector<1x8xf32>
        %cst_23 = arith.constant 9.99999974E-6 : f32
        %49 = vector.broadcast %cst_23 : f32 to vector<1x8xf32>
        %50 = arith.addf %47, %49 : vector<1x8xf32>
        %51 = math.rsqrt %50 : vector<1x8xf32>
        %52 = arith.mulf %48, %51 : vector<1x8xf32>
        %c0_24 = arith.constant 0 : index
        %c0_25 = arith.constant 0 : index
        %53 = vector.load %arg6[%c0_24, %c0_25] : memref<1x8xf32, #tpu.memory_space<vmem>>, vector<1x8xf32>
        %54 = arith.mulf %40, %52 : vector<1x8xf32>
        %55 = arith.subf %53, %54 : vector<1x8xf32>
        %c0_26 = arith.constant 0 : index
        %c0_27 = arith.constant 0 : index
        %56 = vector.load %arg12[%c0_26, %c0_27] : memref<128x8xf32, #tpu.memory_space<vmem>>, vector<128x8xf32>
        %cst_28 = arith.constant dense<0.000000e+00> : vector<8xf32>
        %57 = vector.multi_reduction <add>, %56, %cst_28 [0] : vector<128x8xf32> to vector<8xf32>
        %58 = vector.shape_cast %57 : vector<8xf32> to vector<1x8xf32>
        %cst_29 = arith.constant 1.280000e+02 : f32
        %59 = vector.broadcast %cst_29 : f32 to vector<1x8xf32>
        %60 = arith.divf %58, %59 : vector<1x8xf32>
        %61 = vector.broadcast %60 : vector<1x8xf32> to vector<128x8xf32>
        %62 = arith.subf %56, %61 : vector<128x8xf32>
        %63 = arith.mulf %62, %62 : vector<128x8xf32>
        %cst_30 = arith.constant dense<0.000000e+00> : vector<8xf32>
        %64 = vector.multi_reduction <add>, %63, %cst_30 [0] : vector<128x8xf32> to vector<8xf32>
        %65 = vector.shape_cast %64 : vector<8xf32> to vector<1x8xf32>
        %cst_31 = arith.constant 1.280000e+02 : f32
        %66 = vector.broadcast %cst_31 : f32 to vector<1x8xf32>
        %67 = arith.divf %65, %66 : vector<1x8xf32>
        %c0_32 = arith.constant 0 : index
        %c0_33 = arith.constant 0 : index
        %68 = vector.load %arg7[%c0_32, %c0_33] : memref<1x8xf32, #tpu.memory_space<vmem>>, vector<1x8xf32>
        %cst_34 = arith.constant 9.99999974E-6 : f32
        %69 = vector.broadcast %cst_34 : f32 to vector<1x8xf32>
        %70 = arith.addf %67, %69 : vector<1x8xf32>
        %71 = math.rsqrt %70 : vector<1x8xf32>
        %72 = arith.mulf %68, %71 : vector<1x8xf32>
        %c0_35 = arith.constant 0 : index
        %c0_36 = arith.constant 0 : index
        %73 = vector.load %arg8[%c0_35, %c0_36] : memref<1x8xf32, #tpu.memory_space<vmem>>, vector<1x8xf32>
        %74 = arith.mulf %60, %72 : vector<1x8xf32>
        %75 = arith.subf %73, %74 : vector<1x8xf32>
        %c0_37 = arith.constant 0 : index
        %c0_38 = arith.constant 0 : index
        %76 = vector.load %arg13[%c0_37, %c0_38] : memref<4x8xf32, #tpu.memory_space<vmem>>, vector<1x8xf32>
        tpu.vector_store %arg13[%c0_37, %c0_38], %52 {strides = array<i32>} : memref<4x8xf32, #tpu.memory_space<vmem>>, vector<1x8xf32>,
        %c1_39 = arith.constant 1 : index
        %c0_40 = arith.constant 0 : index
        %77 = vector.load %arg13[%c1_39, %c0_40] : memref<4x8xf32, #tpu.memory_space<vmem>>, vector<1x8xf32>
        tpu.vector_store %arg13[%c1_39, %c0_40], %55 {strides = array<i32>} : memref<4x8xf32, #tpu.memory_space<vmem>>, vector<1x8xf32>,
        %c2_41 = arith.constant 2 : index
        %c0_42 = arith.constant 0 : index
        %78 = vector.load %arg13[%c2_41, %c0_42] : memref<4x8xf32, #tpu.memory_space<vmem>>, vector<1x8xf32>
        tpu.vector_store %arg13[%c2_41, %c0_42], %72 {strides = array<i32>} : memref<4x8xf32, #tpu.memory_space<vmem>>, vector<1x8xf32>,
        %c3_43 = arith.constant 3 : index
        %c0_44 = arith.constant 0 : index
        %79 = vector.load %arg13[%c3_43, %c0_44] : memref<4x8xf32, #tpu.memory_space<vmem>>, vector<1x8xf32>
        tpu.vector_store %arg13[%c3_43, %c0_44], %75 {strides = array<i32>} : memref<4x8xf32, #tpu.memory_space<vmem>>, vector<1x8xf32>,
      } else {
      }
      %11 = arith.index_cast %1 : i32 to index
      %c0 = arith.constant 0 : index
      %12 = vector.load %arg11[%11, %c0] : memref<128x8xf32, #tpu.memory_space<vmem>>, vector<128x8xf32>
      %c0_4 = arith.constant 0 : index
      %c0_5 = arith.constant 0 : index
      %13 = vector.load %arg13[%c0_4, %c0_5] : memref<4x8xf32, #tpu.memory_space<vmem>>, vector<1x8xf32>
      %14 = vector.broadcast %13 : vector<1x8xf32> to vector<128x8xf32>
      %15 = arith.mulf %12, %14 : vector<128x8xf32>
      %c1 = arith.constant 1 : index
      %c0_6 = arith.constant 0 : index
      %16 = vector.load %arg13[%c1, %c0_6] : memref<4x8xf32, #tpu.memory_space<vmem>>, vector<1x8xf32>
      %17 = vector.broadcast %16 : vector<1x8xf32> to vector<128x8xf32>
      %18 = arith.addf %15, %17 : vector<128x8xf32>
      %19 = arith.index_cast %1 : i32 to index
      %c0_7 = arith.constant 0 : index
      %20 = vector.load %arg12[%19, %c0_7] : memref<128x8xf32, #tpu.memory_space<vmem>>, vector<128x8xf32>
      %c2 = arith.constant 2 : index
      %c0_8 = arith.constant 0 : index
      %21 = vector.load %arg13[%c2, %c0_8] : memref<4x8xf32, #tpu.memory_space<vmem>>, vector<1x8xf32>
      %22 = vector.broadcast %21 : vector<1x8xf32> to vector<128x8xf32>
      %23 = arith.mulf %20, %22 : vector<128x8xf32>
      %c3 = arith.constant 3 : index
      %c0_9 = arith.constant 0 : index
      %24 = vector.load %arg13[%c3, %c0_9] : memref<4x8xf32, #tpu.memory_space<vmem>>, vector<1x8xf32>
      %25 = vector.broadcast %24 : vector<1x8xf32> to vector<128x8xf32>
      %26 = arith.addf %23, %25 : vector<128x8xf32>
      %cst = arith.constant 0.00999999977 : f32
      %27 = vector.broadcast %cst : f32 to vector<128x8xf32>
      %28 = arith.mulf %27, %18 : vector<128x8xf32>
      %29 = arith.maximumf %18, %28 : vector<128x8xf32>
      %c0_10 = arith.constant 0 : index
      %c0_11 = arith.constant 0 : index
      %30 = vector.load %arg9[%c0_10, %c0_11] : memref<128x8xf32, #tpu.memory_space<vmem>>, vector<128x8xf32>
      tpu.vector_store %arg9[%c0_10, %c0_11], %29 {strides = array<i32>} : memref<128x8xf32, #tpu.memory_space<vmem>>, vector<128x8xf32>,
      %cst_12 = arith.constant 0.00999999977 : f32
      %31 = vector.broadcast %cst_12 : f32 to vector<128x8xf32>
      %32 = arith.mulf %31, %26 : vector<128x8xf32>
      %33 = arith.maximumf %26, %32 : vector<128x8xf32>
      %34 = arith.truncf %33 : vector<128x8xf32> to vector<128x8xbf16>
      %c0_13 = arith.constant 0 : index
      %c0_14 = arith.constant 0 : index
      %35 = vector.load %arg10[%c0_13, %c0_14] : memref<128x8xbf16, #tpu.memory_space<vmem>>, vector<128x8xbf16>
      tpu.vector_store %arg10[%c0_13, %c0_14], %34 {strides = array<i32>} : memref<128x8xbf16, #tpu.memory_space<vmem>>, vector<128x8xbf16>,
    } else {
    }
    return
  }
  func.func @transform_0(%arg0: i32, %arg1: i32) -> (i32, i32) {
    %c1_i32 = arith.constant 1 : i32
    %0 = arith.subi %c1_i32, %arg0 : i32
    %1 = arith.muli %arg1, %0 : i32
    %c0_i32 = arith.constant 0 : i32
    %c0_i32_0 = arith.constant 0 : i32
    return %1, %c0_i32 : i32, i32
  }
  func.func @transform_1(%arg0: i32, %arg1: i32) -> (i32, i32) {
    %c0_i32 = arith.constant 0 : i32
    %c0_i32_0 = arith.constant 0 : i32
    %c0_i32_1 = arith.constant 0 : i32
    return %c0_i32, %c0_i32_0 : i32, i32
  }
  func.func @transform_2(%arg0: i32, %arg1: i32) -> (i32, i32) {
    %c0_i32 = arith.constant 0 : i32
    %c0_i32_0 = arith.constant 0 : i32
    %c0_i32_1 = arith.constant 0 : i32
    return %c0_i32, %c0_i32_0 : i32, i32
  }
  func.func @transform_3(%arg0: i32, %arg1: i32) -> (i32, i32) {
    %c0_i32 = arith.constant 0 : i32
    %c0_i32_0 = arith.constant 0 : i32
    %c0_i32_1 = arith.constant 0 : i32
    return %c0_i32, %c0_i32_0 : i32, i32
  }
  func.func @transform_4(%arg0: i32, %arg1: i32) -> (i32, i32) {
    %c0_i32 = arith.constant 0 : i32
    %c0_i32_0 = arith.constant 0 : i32
    %c0_i32_1 = arith.constant 0 : i32
    return %c0_i32, %c0_i32_0 : i32, i32
  }
  func.func @transform_5(%arg0: i32, %arg1: i32) -> (i32, i32) {
    %c0_i32 = arith.constant 0 : i32
    %c0_i32_0 = arith.constant 0 : i32
    %c0_i32_1 = arith.constant 0 : i32
    return %c0_i32, %c0_i32_0 : i32, i32
  }
  func.func @transform_6(%arg0: i32, %arg1: i32) -> (i32, i32) {
    %c0_i32 = arith.constant 0 : i32
    %c0_i32_0 = arith.constant 0 : i32
    %c0_i32_1 = arith.constant 0 : i32
    return %c0_i32, %c0_i32_0 : i32, i32
  }
  func.func @transform_7(%arg0: i32, %arg1: i32) -> (i32, i32) {
    %0 = arith.muli %arg1, %arg0 : i32
    %c0_i32 = arith.constant 0 : i32
    %c0_i32_0 = arith.constant 0 : i32
    return %0, %c0_i32 : i32, i32
  }
  func.func @transform_8(%arg0: i32, %arg1: i32) -> (i32, i32) {
    %0 = arith.muli %arg1, %arg0 : i32
    %c0_i32 = arith.constant 0 : i32
    %c0_i32_0 = arith.constant 0 : i32
    return %0, %c0_i32 : i32, i32
  }
}

module attributes {stable_mosaic.version = 11 : i64} {
  func.func @_dual_fc_kernel(%arg0: memref<2x512xbf16, #tpu.memory_space<vmem>>, %arg1: memref<512x32xbf16, #tpu.memory_space<vmem>>, %arg2: memref<1x32xf32, #tpu.memory_space<vmem>>, %arg3: memref<2x32xf32, #tpu.memory_space<vmem>>) attributes {dimension_semantics = [], scalar_prefetch = 0 : i64, scratch_operands = 0 : i64, tpu.core_type = #tpu.core_type<tc>} {
    %c0 = arith.constant 0 : index
    %c0_0 = arith.constant 0 : index
    %0 = vector.load %arg0[%c0, %c0_0] : memref<2x512xbf16, #tpu.memory_space<vmem>>, vector<2x512xbf16>
    %c0_1 = arith.constant 0 : index
    %c0_2 = arith.constant 0 : index
    %1 = vector.load %arg1[%c0_1, %c0_2] : memref<512x32xbf16, #tpu.memory_space<vmem>>, vector<512x32xbf16>
    %cst = arith.constant dense<0.000000e+00> : vector<2x32xf32>
    %2 = tpu.matmul %0, %1, %cst {dimension_numbers = #tpu.dot_dimension_numbers<[1], [0], [0], [1], [0, 0, 1, 1], [], []>} : vector<2x512xbf16>, vector<512x32xbf16>, vector<2x32xf32> -> vector<2x32xf32>
    %c0_3 = arith.constant 0 : index
    %c0_4 = arith.constant 0 : index
    %3 = vector.load %arg2[%c0_3, %c0_4] : memref<1x32xf32, #tpu.memory_space<vmem>>, vector<1x32xf32>
    %4 = vector.broadcast %3 : vector<1x32xf32> to vector<2x32xf32>
    %5 = arith.addf %2, %4 : vector<2x32xf32>
    %c0_5 = arith.constant 0 : index
    %c0_6 = arith.constant 0 : index
    %6 = vector.load %arg3[%c0_5, %c0_6] : memref<2x32xf32, #tpu.memory_space<vmem>>, vector<2x32xf32>
    tpu.vector_store %arg3[%c0_5, %c0_6], %5 {strides = array<i32>} : memref<2x32xf32, #tpu.memory_space<vmem>>, vector<2x32xf32>,
    return
  }
}

</mosaic_0001>

<llo_original>
// kernel: cnn_encode_layer.3
$region0: #{cnn_encode_layer.3}
  #allocation0 [shape = 'u32[]', space=smem, size = 0x4, offset = 0x4, fixed_abs, tag = 'smem constant byte address 0x4 - core index']
  #allocation1 [shape = 'u32[144,128]{1,0:T(1,128)}', space=vmem, size = 0x12000, scoped, tag = 'internal scratch']
  %s0 = inlined_call_operand.vmem [shape: bf16[2,512], index: 0, kind: input, shape index: {}]
  %s1 = inlined_call_operand.vmem [shape: bf16[512,32], index: 1, kind: input, shape index: {}]
  %s2 = inlined_call_operand.vmem [shape: f32[1,32], index: 2, kind: input, shape index: {}]
  %s3 = inlined_call_operand.vmem [shape: f32[2,32], index: 3, kind: output, shape index: {}]
  %s4 = sld [smem:[#allocation0]]
  $region22: #{cnn_encode_layer.3} parent=0
    _
  %s6 = ssub.s32 1, %s4
  %s7 = scalar_select 0, %s6, %s4
  // Predicated region
  $region2: #{cnn_encode_layer.3} parent=0 // pred_check
    _
  $region3: #{cnn_encode_layer.3} parent=0 // pred_check_branch
    %9 = sbr.rel (0) target = $region5
  $region4: #{cnn_encode_layer.3} parent=0 // pred_region
    _
  $region5: #{cnn_encode_layer.3} parent=0 // pred_fallthru
    _
  // Predicated region
  $region6: #{cnn_encode_layer.3} parent=0 // pred_check
    _
  $region7: #{cnn_encode_layer.3} parent=0 // pred_check_branch
    %11 = sbr.rel (0) target = $region9
  $region8: #{cnn_encode_layer.3} parent=0 // pred_region
    _
  $region9: #{cnn_encode_layer.3} parent=0 // pred_fallthru
    _
  // Predicated region
  $region10: #{cnn_encode_layer.3} parent=0 // pred_check
    _
  $region11: #{cnn_encode_layer.3} parent=0 // pred_check_branch
    %13 = sbr.rel (0) target = $region13
  $region12: #{cnn_encode_layer.3} parent=0 // pred_region
    _
  $region13: #{cnn_encode_layer.3} parent=0 // pred_fallthru
    _
  %v15 = vld [vmem:[%s0] sm:$0xf]
  %v16 = vld [vmem:[%s1] sm:$0xf]
  %v17 = vld [vmem:[%s1 + $0x4] sm:$0xf]
  %v18 = vld [vmem:[%s1 + $0x8] sm:$0xf]
  %v19 = vld [vmem:[%s1 + $0xc] sm:$0xf]
  %v20 = vld [vmem:[%s1 + $0x10] sm:$0xf]
  %v21 = vld [vmem:[%s1 + $0x14] sm:$0xf]
  %v22 = vld [vmem:[%s1 + $0x18] sm:$0xf]
  %v23 = vld [vmem:[%s1 + $0x1c] sm:$0xf]
  %v24 = vld [vmem:[%s1 + $0x20] sm:$0xf]
  %v25 = vld [vmem:[%s1 + $0x24] sm:$0xf]
  %v26 = vld [vmem:[%s1 + $0x28] sm:$0xf]
  %v27 = vld [vmem:[%s1 + $0x2c] sm:$0xf]
  %v28 = vld [vmem:[%s1 + $0x30] sm:$0xf]
  %v29 = vld [vmem:[%s1 + $0x34] sm:$0xf]
  %v30 = vld [vmem:[%s1 + $0x38] sm:$0xf]
  %v31 = vld [vmem:[%s1 + $0x3c] sm:$0xf]
  %v32 = vld [vmem:[%s1 + $0x40] sm:$0xf]
  %v33 = vld [vmem:[%s1 + $0x44] sm:$0xf]
  %v34 = vld [vmem:[%s1 + $0x48] sm:$0xf]
  %v35 = vld [vmem:[%s1 + $0x4c] sm:$0xf]
  %v36 = vld [vmem:[%s1 + $0x50] sm:$0xf]
  %v37 = vld [vmem:[%s1 + $0x54] sm:$0xf]
  %v38 = vld [vmem:[%s1 + $0x58] sm:$0xf]
  %v39 = vld [vmem:[%s1 + $0x5c] sm:$0xf]
  %v40 = vld [vmem:[%s1 + $0x60] sm:$0xf]
  %v41 = vld [vmem:[%s1 + $0x64] sm:$0xf]
  %v42 = vld [vmem:[%s1 + $0x68] sm:$0xf]
  %v43 = vld [vmem:[%s1 + $0x6c] sm:$0xf]
  %v44 = vld [vmem:[%s1 + $0x70] sm:$0xf]
  %v45 = vld [vmem:[%s1 + $0x74] sm:$0xf]
  %v46 = vld [vmem:[%s1 + $0x78] sm:$0xf]
  %v47 = vld [vmem:[%s1 + $0x7c] sm:$0xf]
  %v48 = vld [vmem:[%s1 + $0x80] sm:$0xf]
  %v49 = vld [vmem:[%s1 + $0x84] sm:$0xf]
  %v50 = vld [vmem:[%s1 + $0x88] sm:$0xf]
  %v51 = vld [vmem:[%s1 + $0x8c] sm:$0xf]
  %v52 = vld [vmem:[%s1 + $0x90] sm:$0xf]
  %v53 = vld [vmem:[%s1 + $0x94] sm:$0xf]
  %v54 = vld [vmem:[%s1 + $0x98] sm:$0xf]
  %v55 = vld [vmem:[%s1 + $0x9c] sm:$0xf]
  %v56 = vld [vmem:[%s1 + $0xa0] sm:$0xf]
  %v57 = vld [vmem:[%s1 + $0xa4] sm:$0xf]
  %v58 = vld [vmem:[%s1 + $0xa8] sm:$0xf]
  %v59 = vld [vmem:[%s1 + $0xac] sm:$0xf]
  %v60 = vld [vmem:[%s1 + $0xb0] sm:$0xf]
  %v61 = vld [vmem:[%s1 + $0xb4] sm:$0xf]
  %v62 = vld [vmem:[%s1 + $0xb8] sm:$0xf]
  %v63 = vld [vmem:[%s1 + $0xbc] sm:$0xf]
  %v64 = vld [vmem:[%s1 + $0xc0] sm:$0xf]
  %v65 = vld [vmem:[%s1 + $0xc4] sm:$0xf]
  %v66 = vld [vmem:[%s1 + $0xc8] sm:$0xf]
  %v67 = vld [vmem:[%s1 + $0xcc] sm:$0xf]
  %v68 = vld [vmem:[%s1 + $0xd0] sm:$0xf]
  %v69 = vld [vmem:[%s1 + $0xd4] sm:$0xf]
  %v70 = vld [vmem:[%s1 + $0xd8] sm:$0xf]
  %v71 = vld [vmem:[%s1 + $0xdc] sm:$0xf]
  %v72 = vld [vmem:[%s1 + $0xe0] sm:$0xf]
  %v73 = vld [vmem:[%s1 + $0xe4] sm:$0xf]
  %v74 = vld [vmem:[%s1 + $0xe8] sm:$0xf]
  %v75 = vld [vmem:[%s1 + $0xec] sm:$0xf]
  %v76 = vld [vmem:[%s1 + $0xf0] sm:$0xf]
  %v77 = vld [vmem:[%s1 + $0xf4] sm:$0xf]
  %v78 = vld [vmem:[%s1 + $0xf8] sm:$0xf]
  %v79 = vld [vmem:[%s1 + $0xfc] sm:$0xf]
  %v80 = vld [vmem:[%s2] sm:$0x1]
  %v82 = vlaneseq
  %v83 = vshrl.u32 %v82, 7
  %v84 = vsub.s32 0, %v83
  %v85 = vrot.slane %v80, %v84
  %v89 = vunpack.c.l.s4 1966171168
  %v90 = vunpack.c.0.s8 %v89
  %v91 = vlaneseq
  %v92 = vshrl.u32 %v91, 7
  %v93 = vsub.s32 %v90, %v92
  %v94 = vrot.slane %v15, %v93
  %v95 = vcombine.high %v94, %v94
  %v97 = vunpack.c.l.s4 1966171168
  %v98 = vunpack.c.0.s8 %v97
  %v99 = vlaneseq
  %v100 = vshrl.u32 %v99, 7
  %v101 = vsub.s32 %v98, %v100
  %v102 = vrot.slane %v94, %v101
  %v104 = vunpack.c.l.s4 1966171168
  %v105 = vunpack.c.0.s8 %v104
  %v106 = vlaneseq
  %v107 = vshrl.u32 %v106, 7
  %v108 = vsub.s32 %v105, %v107
  %v109 = vrot.slane %v95, %v108
  %v110 = vcombine.high %v102, %v102
  %v111 = vcombine.high %v109, %v109
  %v180 = vunpack.c.l.b16 %v16
  %v181 = vunpack.c.l.b16 %v17
  %v182 = vunpack.c.l.b16 %v18
  %v183 = vunpack.c.l.b16 %v19
  %v184 = vunpack.c.l.b16 %v20
  %v185 = vunpack.c.l.b16 %v21
  %v186 = vunpack.c.l.b16 %v22
  %v187 = vunpack.c.l.b16 %v23
  %v188 = vunpack.c.l.b16 %v24
  %v189 = vunpack.c.l.b16 %v25
  %v190 = vunpack.c.l.b16 %v26
  %v191 = vunpack.c.l.b16 %v27
  %v192 = vunpack.c.l.b16 %v28
  %v193 = vunpack.c.l.b16 %v29
  %v194 = vunpack.c.l.b16 %v30
  %v195 = vunpack.c.l.b16 %v31
  %v196 = vunpack.c.l.b16 %v32
  %v197 = vunpack.c.l.b16 %v33
  %v198 = vunpack.c.l.b16 %v34
  %v199 = vunpack.c.l.b16 %v35
  %v200 = vunpack.c.l.b16 %v36
  %v201 = vunpack.c.l.b16 %v37
  %v202 = vunpack.c.l.b16 %v38
  %v203 = vunpack.c.l.b16 %v39
  %v204 = vunpack.c.l.b16 %v40
  %v205 = vunpack.c.l.b16 %v41
  %v206 = vunpack.c.l.b16 %v42
  %v207 = vunpack.c.l.b16 %v43
  %v208 = vunpack.c.l.b16 %v44
  %v209 = vunpack.c.l.b16 %v45
  %v210 = vunpack.c.l.b16 %v46
  %v211 = vunpack.c.l.b16 %v47
  %v212 = vunpack.c.l.b16 %v48
  %v213 = vunpack.c.l.b16 %v49
  %v214 = vunpack.c.l.b16 %v50
  %v215 = vunpack.c.l.b16 %v51
  %v216 = vunpack.c.l.b16 %v52
  %v217 = vunpack.c.l.b16 %v53
  %v218 = vunpack.c.l.b16 %v54
  %v219 = vunpack.c.l.b16 %v55
  %v220 = vunpack.c.l.b16 %v56
  %v221 = vunpack.c.l.b16 %v57
  %v222 = vunpack.c.l.b16 %v58
  %v223 = vunpack.c.l.b16 %v59
  %v224 = vunpack.c.l.b16 %v60
  %v225 = vunpack.c.l.b16 %v61
  %v226 = vunpack.c.l.b16 %v62
  %v227 = vunpack.c.l.b16 %v63
  %v228 = vunpack.c.l.b16 %v64
  %v229 = vunpack.c.l.b16 %v65
  %v230 = vunpack.c.l.b16 %v66
  %v231 = vunpack.c.l.b16 %v67
  %v232 = vunpack.c.l.b16 %v68
  %v233 = vunpack.c.l.b16 %v69
  %v234 = vunpack.c.l.b16 %v70
  %v235 = vunpack.c.l.b16 %v71
  %v236 = vunpack.c.l.b16 %v72
  %v237 = vunpack.c.l.b16 %v73
  %v238 = vunpack.c.l.b16 %v74
  %v239 = vunpack.c.l.b16 %v75
  %v240 = vunpack.c.l.b16 %v76
  %v241 = vunpack.c.l.b16 %v77
  %v242 = vunpack.c.l.b16 %v78
  %v243 = vunpack.c.l.b16 %v79
  %v244 = vpack.c.b16 %v181, %v180
  %v245 = vpack.c.b16 %v183, %v182
  %v246 = vpack.c.b16 %v185, %v184
  %v247 = vpack.c.b16 %v187, %v186
  %v248 = vpack.c.b16 %v189, %v188
  %v249 = vpack.c.b16 %v191, %v190
  %v250 = vpack.c.b16 %v193, %v192
  %v251 = vpack.c.b16 %v195, %v194
  %v252 = vpack.c.b16 %v197, %v196
  %v253 = vpack.c.b16 %v199, %v198
  %v254 = vpack.c.b16 %v201, %v200
  %v255 = vpack.c.b16 %v203, %v202
  %v256 = vpack.c.b16 %v205, %v204
  %v257 = vpack.c.b16 %v207, %v206
  %v258 = vpack.c.b16 %v209, %v208
  %v259 = vpack.c.b16 %v211, %v210
  %v260 = vpack.c.b16 %v213, %v212
  %v261 = vpack.c.b16 %v215, %v214
  %v262 = vpack.c.b16 %v217, %v216
  %v263 = vpack.c.b16 %v219, %v218
  %v264 = vpack.c.b16 %v221, %v220
  %v265 = vpack.c.b16 %v223, %v222
  %v266 = vpack.c.b16 %v225, %v224
  %v267 = vpack.c.b16 %v227, %v226
  %v268 = vpack.c.b16 %v229, %v228
  %v269 = vpack.c.b16 %v231, %v230
  %v270 = vpack.c.b16 %v233, %v232
  %v271 = vpack.c.b16 %v235, %v234
  %v272 = vpack.c.b16 %v237, %v236
  %v273 = vpack.c.b16 %v239, %v238
  %v274 = vpack.c.b16 %v241, %v240
  %v275 = vpack.c.b16 %v243, %v242
  %308 = vmatprep.subr.bf16.mxu0 0
  %309 = vmatpush1.bf16.msra.mxu0 %v244
  %310 = vmatprep.subr.bf16.mxu0 0
  %311 = vmatpush1.bf16.msra.mxu0 %v245
  %312 = vmatprep.subr.bf16.mxu0 0
  %313 = vmatpush1.bf16.msra.mxu0 %v246
  %314 = vmatprep.subr.bf16.mxu0 0
  %315 = vmatpush1.bf16.msra.mxu0 %v247
  %316 = vmatprep.subr.bf16.mxu0 0
  %317 = vmatpush1.bf16.msra.mxu0 %v248
  %318 = vmatprep.subr.bf16.mxu0 0
  %319 = vmatpush1.bf16.msra.mxu0 %v249
  %320 = vmatprep.subr.bf16.mxu0 0
  %321 = vmatpush1.bf16.msra.mxu0 %v250
  %322 = vmatprep.subr.bf16.mxu0 0
  %323 = vmatpush1.bf16.msra.mxu0 %v251
  %324 = vmatprep.subr.bf16.mxu0 0
  %325 = vmatpush1.bf16.msra.mxu0 %v252
  %326 = vmatprep.subr.bf16.mxu0 0
  %327 = vmatpush1.bf16.msra.mxu0 %v253
  %328 = vmatprep.subr.bf16.mxu0 0
  %329 = vmatpush1.bf16.msra.mxu0 %v254
  %330 = vmatprep.subr.bf16.mxu0 0
  %331 = vmatpush1.bf16.msra.mxu0 %v255
  %332 = vmatprep.subr.bf16.mxu0 0
  %333 = vmatpush1.bf16.msra.mxu0 %v256
  %334 = vmatprep.subr.bf16.mxu0 0
  %335 = vmatpush1.bf16.msra.mxu0 %v257
  %336 = vmatprep.subr.bf16.mxu0 0
  %337 = vmatpush1.bf16.msra.mxu0 %v258
  %338 = vmatprep.subr.bf16.mxu0 0
  %339 = vmatpush1.bf16.msra.mxu0 %v259
  %340 = vmatprep.mubr.bf16.mxu0 %v109
  %341 = vmatmul.mubr.bf16.gmra.mrb[0].mxu0 %v102
  %v342 = vpop.f32.mrb[0].mxu0
  %v343 = vadd.f32 %v85, %v342
  %v344 = vpop.f32.mrb[0].mxu0
  %v345 = vpop.f32.mrb[0].mxu0
  %v346 = vpop.f32.mrb[0].mxu0
  %347 = vdwg.mxu0
  %348 = vmatprep.subr.bf16.mxu0 0
  %349 = vmatpush1.bf16.msra.mxu0 %v260
  %350 = vmatprep.subr.bf16.mxu0 0
  %351 = vmatpush1.bf16.msra.mxu0 %v261
  %352 = vmatprep.subr.bf16.mxu0 0
  %353 = vmatpush1.bf16.msra.mxu0 %v262
  %354 = vmatprep.subr.bf16.mxu0 0
  %355 = vmatpush1.bf16.msra.mxu0 %v263
  %356 = vmatprep.subr.bf16.mxu0 0
  %357 = vmatpush1.bf16.msra.mxu0 %v264
  %358 = vmatprep.subr.bf16.mxu0 0
  %359 = vmatpush1.bf16.msra.mxu0 %v265
  %360 = vmatprep.subr.bf16.mxu0 0
  %361 = vmatpush1.bf16.msra.mxu0 %v266
  %362 = vmatprep.subr.bf16.mxu0 0
  %363 = vmatpush1.bf16.msra.mxu0 %v267
  %364 = vmatprep.subr.bf16.mxu0 0
  %365 = vmatpush1.bf16.msra.mxu0 %v268
  %366 = vmatprep.subr.bf16.mxu0 0
  %367 = vmatpush1.bf16.msra.mxu0 %v269
  %368 = vmatprep.subr.bf16.mxu0 0
  %369 = vmatpush1.bf16.msra.mxu0 %v270
  %370 = vmatprep.subr.bf16.mxu0 0
  %371 = vmatpush1.bf16.msra.mxu0 %v271
  %372 = vmatprep.subr.bf16.mxu0 0
  %373 = vmatpush1.bf16.msra.mxu0 %v272
  %374 = vmatprep.subr.bf16.mxu0 0
  %375 = vmatpush1.bf16.msra.mxu0 %v273
  %376 = vmatprep.subr.bf16.mxu0 0
  %377 = vmatpush1.bf16.msra.mxu0 %v274
  %378 = vmatprep.subr.bf16.mxu0 0
  %379 = vmatpush1.bf16.msra.mxu0 %v275
  %380 = vmatprep.mubr.bf16.mxu0 %v111
  %381 = vmatmul.mubr.bf16.gmra.mrb[0].mxu0 %v110
  %v382 = vpop.f32.mrb[0].mxu0
  %v383 = vadd.f32 %v343, %v382
  %v384 = vpop.f32.mrb[0].mxu0
  %v385 = vpop.f32.mrb[0].mxu0
  %v386 = vpop.f32.mrb[0].mxu0
  %387 = vdwg.mxu0
  %vm388 = vcmask 254976
  %389 = vst.msk [vmem:[%s3] sm:$0x3] %vm388, %v383
  // Predicated region
  $region14: #{cnn_encode_layer.3} parent=0 // pred_check
    _
  $region15: #{cnn_encode_layer.3} parent=0 // pred_check_branch
    %391 = sbr.rel (0) target = $region17
  $region16: #{cnn_encode_layer.3} parent=0 // pred_region
    _
  $region17: #{cnn_encode_layer.3} parent=0 // pred_fallthru
    _
  // Predicated region
  $region18: #{cnn_encode_layer.3} parent=0 // pred_check
    _
  $region19: #{cnn_encode_layer.3} parent=0 // pred_check_branch
    %393 = sbr.rel (0) target = $region21
  $region20: #{cnn_encode_layer.3} parent=0 // pred_region
    _
  $region21: #{cnn_encode_layer.3} parent=0 // pred_fallthru
    _

// kernel: cnn_encode_layer.2
$region0: #{cnn_encode_layer.2}
  #allocation0 [shape = 'u32[]', space=smem, size = 0x4, offset = 0x4, fixed_abs, tag = 'smem constant byte address 0x4 - core index']
  #allocation1 [shape = 'u32[144,128]{1,0:T(1,128)}', space=vmem, size = 0x12000, scoped, tag = 'internal scratch']
  #allocation2 [shape = 'f32[128,8]{1,0:T(8,128)}', space=vmem, size = 0x10000, scoped, tag = 'scratch operand']
  #allocation3 [shape = 'f32[128,8]{1,0:T(8,128)}', space=vmem, size = 0x10000, scoped, tag = 'scratch operand']
  #allocation4 [shape = 'f32[4,8]{1,0:T(4,128)}', space=vmem, size = 0x800, scoped, tag = 'scratch operand']
  %s0 = inlined_call_operand.vmem [shape: bf16[128,128], index: 0, kind: input, shape index: {}]
  %s1 = inlined_call_operand.vmem [shape: bf16[128,8], index: 1, kind: input, shape index: {}]
  %s2 = inlined_call_operand.vmem [shape: bf16[128,8], index: 2, kind: input, shape index: {}]
  %s3 = inlined_call_operand.vmem [shape: f32[1,8], index: 3, kind: input, shape index: {}]
  %s4 = inlined_call_operand.vmem [shape: f32[1,8], index: 4, kind: input, shape index: {}]
  %s5 = inlined_call_operand.vmem [shape: f32[1,8], index: 5, kind: input, shape index: {}]
  %s6 = inlined_call_operand.vmem [shape: f32[1,8], index: 6, kind: input, shape index: {}]
  %s7 = inlined_call_operand.vmem [shape: f32[128,8], index: 7, kind: output, shape index: {0}]
  %s8 = inlined_call_operand.vmem [shape: bf16[128,8], index: 8, kind: output, shape index: {1}]
  %9 = xla_tuple %s7, %s8
  %s10 = sld [smem:[#allocation0]]
  $region81: #{cnn_encode_layer.2} parent=0
    _
  %s12 = ssub.s32 1, %s10
  %s13 = scalar_select 0, %s12, %s10
  loop: start=0, step=1, limit=4
  $region2: #{cnn_encode_layer.2} parent=0 // loop_pre_header
    _
  $region3: #{cnn_encode_layer.2} parent=0 // loop_header
    %s15 = sphi 0, %s19
    %p16 = scmp.ge.s32.totalorder %s15, 4
    %s22 = sphi 0, %s34
    %s23 = sphi 0, %s30
    %s24 = sphi 0, %s22
    %s25 = sphi 0, %s23
    %s26 = sphi 0, %s24
    %s27 = sphi 0, %s25
    %s41 = sphi 0, %s43
    %s44 = sphi 0, %s41
    %s45 = sphi 0, %s44
    %s61 = sphi 0, %s45
    %s65 = sphi 0, %s65
    %s67 = sphi 0, %s65
    %s68 = sphi 0, %s67
    %s82 = sphi 0, %s68
    %s86 = sphi 0, %s86
    %s88 = sphi 0, %s86
    %s89 = sphi 0, %s88
    %s103 = sphi 0, %s89
    %s107 = sphi 0, %s107
    %s109 = sphi 0, %s107
    %s110 = sphi 0, %s109
    %s124 = sphi 0, %s110
    %s128 = sphi 0, %s128
    %s130 = sphi 0, %s128
    %s131 = sphi 0, %s130
    %s145 = sphi 0, %s131
    %s149 = sphi 0, %s149
    %s151 = sphi 0, %s149
    %s152 = sphi 0, %s151
    %s166 = sphi 0, %s152
    %s170 = sphi 0, %s170
    %s172 = sphi 0, %s170
    %s173 = sphi 0, %s172
    %s187 = sphi 0, %s173
    %s195 = sphi 0, %s197
    %s198 = sphi 0, %s195
    %s199 = sphi 0, %s198
    %s215 = sphi 0, %s199
    %s223 = sphi 0, %s225
    %s226 = sphi 0, %s223
    %s227 = sphi 0, %s226
    %s243 = sphi 0, %s227
  $region4: #{cnn_encode_layer.2} parent=0 // loop_header_branch
    %18 = sbr.rel (%p16) target = $region8
  $region5: #{cnn_encode_layer.2} parent=0 // loop_body
    %s20 = ssub.s32 %s15, 1
    %s21 = ssub.s32 %s15, 2
    %s28 = sadd.s32 1, %s23
    %p29 = scmp.ge.s32.totalorder %s28, 1
    %s30 = scalar_select %p29, 0, %s28
    %s31 = sadd.s32 1, %s22
    %s32 = scalar_select %p29, %s31, %s22
    %p33 = scmp.ge.s32.totalorder %s32, 2
    %s34 = scalar_select %p33, 0, %s32
    %s35 = ssub.s32 1, %s22
    %s36 = smul.u32 %s23, %s35
    %s37 = ssub.s32 1, %s34
    %s38 = smul.u32 %s30, %s37
    %s39 = ssub.s32 %s36, %s38
    %p40 = scmp.eq.s32.totalorder %s39, 0
    %s42 = sadd.s32 %s41, 1
    %s43 = scalar_select %p40, %s41, %s42
    %p46 = pneg %p40
    %p47 = scmp.eq.s32.totalorder %s15, 1
    %p48 = por %p46, %p47
    %p49 = scmp.ne.s32.totalorder %s41, %s44
    %p50 = scmp.eq.s32.totalorder %s15, 0
    %p51 = por %p49, %p50
    %p52 = scmp.ne.s32.totalorder %s41, %s44
    %p53 = scmp.eq.s32.totalorder %s20, 1
    %p54 = por %p52, %p53
    %p55 = scmp.ne.s32.totalorder %s44, %s45
    %p56 = scmp.eq.s32.totalorder %s20, 0
    %p57 = por %p55, %p56
    %p58 = scmp.ne.s32.totalorder %s44, %s45
    %p59 = scmp.eq.s32.totalorder %s21, 1
    %p60 = por %p58, %p59
    %p62 = scmp.ne.s32.totalorder %s45, %s61
    %p63 = scmp.eq.s32.totalorder %s21, 0
    %p64 = por %p62, %p63
    %s66 = sadd.s32 %s65, 1
    %p69 = scmp.eq.s32.totalorder %s15, 1
    %p70 = scmp.ne.s32.totalorder %s65, %s67
    %p71 = scmp.eq.s32.totalorder %s15, 0
    %p72 = por %p70, %p71
    %p73 = scmp.ne.s32.totalorder %s65, %s67
    %p74 = scmp.eq.s32.totalorder %s20, 1
    %p75 = por %p73, %p74
    %p76 = scmp.ne.s32.totalorder %s67, %s68
    %p77 = scmp.eq.s32.totalorder %s20, 0
    %p78 = por %p76, %p77
    %p79 = scmp.ne.s32.totalorder %s67, %s68
    %p80 = scmp.eq.s32.totalorder %s21, 1
    %p81 = por %p79, %p80
    %p83 = scmp.ne.s32.totalorder %s68, %s82
    %p84 = scmp.eq.s32.totalorder %s21, 0
    %p85 = por %p83, %p84
    %s87 = sadd.s32 %s86, 1
    %p90 = scmp.eq.s32.totalorder %s15, 1
    %p91 = scmp.ne.s32.totalorder %s86, %s88
    %p92 = scmp.eq.s32.totalorder %s15, 0
    %p93 = por %p91, %p92
    %p94 = scmp.ne.s32.totalorder %s86, %s88
    %p95 = scmp.eq.s32.totalorder %s20, 1
    %p96 = por %p94, %p95
    %p97 = scmp.ne.s32.totalorder %s88, %s89
    %p98 = scmp.eq.s32.totalorder %s20, 0
    %p99 = por %p97, %p98
    %p100 = scmp.ne.s32.totalorder %s88, %s89
    %p101 = scmp.eq.s32.totalorder %s21, 1
    %p102 = por %p100, %p101
    %p104 = scmp.ne.s32.totalorder %s89, %s103
    %p105 = scmp.eq.s32.totalorder %s21, 0
    %p106 = por %p104, %p105
    %s108 = sadd.s32 %s107, 1
    %p111 = scmp.eq.s32.totalorder %s15, 1
    %p112 = scmp.ne.s32.totalorder %s107, %s109
    %p113 = scmp.eq.s32.totalorder %s15, 0
    %p114 = por %p112, %p113
    %p115 = scmp.ne.s32.totalorder %s107, %s109
    %p116 = scmp.eq.s32.totalorder %s20, 1
    %p117 = por %p115, %p116
    %p118 = scmp.ne.s32.totalorder %s109, %s110
    %p119 = scmp.eq.s32.totalorder %s20, 0
    %p120 = por %p118, %p119
    %p121 = scmp.ne.s32.totalorder %s109, %s110
    %p122 = scmp.eq.s32.totalorder %s21, 1
    %p123 = por %p121, %p122
    %p125 = scmp.ne.s32.totalorder %s110, %s124
    %p126 = scmp.eq.s32.totalorder %s21, 0
    %p127 = por %p125, %p126
    %s129 = sadd.s32 %s128, 1
    %p132 = scmp.eq.s32.totalorder %s15, 1
    %p133 = scmp.ne.s32.totalorder %s128, %s130
    %p134 = scmp.eq.s32.totalorder %s15, 0
    %p135 = por %p133, %p134
    %p136 = scmp.ne.s32.totalorder %s128, %s130
    %p137 = scmp.eq.s32.totalorder %s20, 1
    %p138 = por %p136, %p137
    %p139 = scmp.ne.s32.totalorder %s130, %s131
    %p140 = scmp.eq.s32.totalorder %s20, 0
    %p141 = por %p139, %p140
    %p142 = scmp.ne.s32.totalorder %s130, %s131
    %p143 = scmp.eq.s32.totalorder %s21, 1
    %p144 = por %p142, %p143
    %p146 = scmp.ne.s32.totalorder %s131, %s145
    %p147 = scmp.eq.s32.totalorder %s21, 0
    %p148 = por %p146, %p147
    %s150 = sadd.s32 %s149, 1
    %p153 = scmp.eq.s32.totalorder %s15, 1
    %p154 = scmp.ne.s32.totalorder %s149, %s151
    %p155 = scmp.eq.s32.totalorder %s15, 0
    %p156 = por %p154, %p155
    %p157 = scmp.ne.s32.totalorder %s149, %s151
    %p158 = scmp.eq.s32.totalorder %s20, 1
    %p159 = por %p157, %p158
    %p160 = scmp.ne.s32.totalorder %s151, %s152
    %p161 = scmp.eq.s32.totalorder %s20, 0
    %p162 = por %p160, %p161
    %p163 = scmp.ne.s32.totalorder %s151, %s152
    %p164 = scmp.eq.s32.totalorder %s21, 1
    %p165 = por %p163, %p164
    %p167 = scmp.ne.s32.totalorder %s152, %s166
    %p168 = scmp.eq.s32.totalorder %s21, 0
    %p169 = por %p167, %p168
    %s171 = sadd.s32 %s170, 1
    %p174 = scmp.eq.s32.totalorder %s15, 1
    %p175 = scmp.ne.s32.totalorder %s170, %s172
    %p176 = scmp.eq.s32.totalorder %s15, 0
    %p177 = por %p175, %p176
    %p178 = scmp.ne.s32.totalorder %s170, %s172
    %p179 = scmp.eq.s32.totalorder %s20, 1
    %p180 = por %p178, %p179
    %p181 = scmp.ne.s32.totalorder %s172, %s173
    %p182 = scmp.eq.s32.totalorder %s20, 0
    %p183 = por %p181, %p182
    %p184 = scmp.ne.s32.totalorder %s172, %s173
    %p185 = scmp.eq.s32.totalorder %s21, 1
    %p186 = por %p184, %p185
    %p188 = scmp.ne.s32.totalorder %s173, %s187
    %p189 = scmp.eq.s32.totalorder %s21, 0
    %p190 = por %p188, %p189
    %s191 = smul.u32 %s23, %s22
    %s192 = smul.u32 %s30, %s34
    %s193 = ssub.s32 %s191, %s192
    %p194 = scmp.eq.s32.totalorder %s193, 0
    %s196 = sadd.s32 %s195, 1
    %s197 = scalar_select %p194, %s195, %s196
    %p200 = pneg %p194
    %p201 = scmp.eq.s32.totalorder %s15, 1
    %p202 = por %p200, %p201
    %p203 = scmp.ne.s32.totalorder %s195, %s198
    %p204 = scmp.eq.s32.totalorder %s15, 0
    %p205 = por %p203, %p204
    %p206 = scmp.ne.s32.totalorder %s195, %s198
    %p207 = scmp.eq.s32.totalorder %s20, 1
    %p208 = por %p206, %p207
    %p209 = scmp.ne.s32.totalorder %s198, %s199
    %p210 = scmp.eq.s32.totalorder %s20, 0
    %p211 = por %p209, %p210
    %p212 = scmp.ne.s32.totalorder %s198, %s199
    %p213 = scmp.eq.s32.totalorder %s21, 1
    %p214 = por %p212, %p213
    %p216 = scmp.ne.s32.totalorder %s199, %s215
    %p217 = scmp.eq.s32.totalorder %s21, 0
    %p218 = por %p216, %p217
    %s219 = smul.u32 %s23, %s22
    %s220 = smul.u32 %s30, %s34
    %s221 = ssub.s32 %s219, %s220
    %p222 = scmp.eq.s32.totalorder %s221, 0
    %s224 = sadd.s32 %s223, 1
    %s225 = scalar_select %p222, %s223, %s224
    %p228 = pneg %p222
    %p229 = scmp.eq.s32.totalorder %s15, 1
    %p230 = por %p228, %p229
    %p231 = scmp.ne.s32.totalorder %s223, %s226
    %p232 = scmp.eq.s32.totalorder %s15, 0
    %p233 = por %p231, %p232
    %p234 = scmp.ne.s32.totalorder %s223, %s226
    %p235 = scmp.eq.s32.totalorder %s20, 1
    %p236 = por %p234, %p235
    %p237 = scmp.ne.s32.totalorder %s226, %s227
    %p238 = scmp.eq.s32.totalorder %s20, 0
    %p239 = por %p237, %p238
    %p240 = scmp.ne.s32.totalorder %s226, %s227
    %p241 = scmp.eq.s32.totalorder %s21, 1
    %p242 = por %p240, %p241
    %p244 = scmp.ne.s32.totalorder %s227, %s243
    %p245 = scmp.eq.s32.totalorder %s21, 0
    %p246 = por %p244, %p245
    %p247 = scmp.le.s32.totalorder 1, %s15
    %p248 = scmp.lt.s32.totalorder %s15, 3
    %p249 = pnand %p247, %p248
    %p250 = pneg %p249
    // Predicated region
    $region9: #{cnn_encode_layer.2} parent=5 // pred_check
      _
    $region10: #{cnn_encode_layer.2} parent=5 // pred_check_branch
      %252 = sbr.rel (%p249) target = $region12
    $region11: #{cnn_encode_layer.2} parent=5 // pred_region
      %s253 = ssub.s32 %s15, 1
      // Predicated region
      $region13: #{cnn_encode_layer.2} parent=11 // pred_check
        %p254 = pneg %p78
      $region14: #{cnn_encode_layer.2} parent=11 // pred_check_branch
        %256 = sbr.rel (%p254) target = $region16
      $region15: #{cnn_encode_layer.2} parent=11 // pred_region
        _
      $region16: #{cnn_encode_layer.2} parent=11 // pred_fallthru
        _
      // Predicated region
      $region17: #{cnn_encode_layer.2} parent=11 // pred_check
        %p257 = pneg %p99
      $region18: #{cnn_encode_layer.2} parent=11 // pred_check_branch
        %259 = sbr.rel (%p257) target = $region20
      $region19: #{cnn_encode_layer.2} parent=11 // pred_region
        _
      $region20: #{cnn_encode_layer.2} parent=11 // pred_fallthru
        _
      // Predicated region
      $region21: #{cnn_encode_layer.2} parent=11 // pred_check
        %p260 = pneg %p120
      $region22: #{cnn_encode_layer.2} parent=11 // pred_check_branch
        %262 = sbr.rel (%p260) target = $region24
      $region23: #{cnn_encode_layer.2} parent=11 // pred_region
        _
      $region24: #{cnn_encode_layer.2} parent=11 // pred_fallthru
        _
      // Predicated region
      $region25: #{cnn_encode_layer.2} parent=11 // pred_check
        %p263 = pneg %p141
      $region26: #{cnn_encode_layer.2} parent=11 // pred_check_branch
        %265 = sbr.rel (%p263) target = $region28
      $region27: #{cnn_encode_layer.2} parent=11 // pred_region
        _
      $region28: #{cnn_encode_layer.2} parent=11 // pred_fallthru
        _
      // Predicated region
      $region29: #{cnn_encode_layer.2} parent=11 // pred_check
        %p266 = pneg %p162
      $region30: #{cnn_encode_layer.2} parent=11 // pred_check_branch
        %268 = sbr.rel (%p266) target = $region32
      $region31: #{cnn_encode_layer.2} parent=11 // pred_region
        _
      $region32: #{cnn_encode_layer.2} parent=11 // pred_fallthru
        _
      // Predicated region
      $region33: #{cnn_encode_layer.2} parent=11 // pred_check
        %p269 = pneg %p183
      $region34: #{cnn_encode_layer.2} parent=11 // pred_check_branch
        %271 = sbr.rel (%p269) target = $region36
      $region35: #{cnn_encode_layer.2} parent=11 // pred_region
        _
      $region36: #{cnn_encode_layer.2} parent=11 // pred_fallthru
        _
    $region12: #{cnn_encode_layer.2} parent=5 // pred_fallthru
      _
    %p272 = scmp.lt.s32.totalorder %s15, 2
    // Predicated region
    $region37: #{cnn_encode_layer.2} parent=5 // pred_check
      %p273 = pneg %p272
    $region38: #{cnn_encode_layer.2} parent=5 // pred_check_branch
      %275 = sbr.rel (%p273) target = $region40
    $region39: #{cnn_encode_layer.2} parent=5 // pred_region
      // Predicated region
      $region41: #{cnn_encode_layer.2} parent=39 // pred_check
        %p276 = pneg %p51
      $region42: #{cnn_encode_layer.2} parent=39 // pred_check_branch
        %278 = sbr.rel (%p276) target = $region44
      $region43: #{cnn_encode_layer.2} parent=39 // pred_region
        %s279 = ssub.s32 1, %s22
        %s280 = smul.u32 %s23, %s279
        %s281 = smul.u32 16, %s280
        %p282 = scmp.lt.s32.totalorder %s281, 15
        %s283 = scalar_select %p282, %s281, 15
        %s284 = smul.addr %s283, 4
        %s285 = scalar_lea.vmem %s0, %s284
        %s286 = ssub.s32 1, %s22
        %s287 = smul.u32 %s23, %s286
        %s288 = smul.u32 16, %s287
      $region44: #{cnn_encode_layer.2} parent=39 // pred_fallthru
        _
    $region40: #{cnn_encode_layer.2} parent=5 // pred_fallthru
      _
    %p289 = scmp.le.s32.totalorder 1, %s15
    %p290 = scmp.lt.s32.totalorder %s15, 3
    %p291 = pnand %p289, %p290
    %p292 = pneg %p291
    // Predicated region
    $region45: #{cnn_encode_layer.2} parent=5 // pred_check
      _
    $region46: #{cnn_encode_layer.2} parent=5 // pred_check_branch
      %294 = sbr.rel (%p291) target = $region48
    $region47: #{cnn_encode_layer.2} parent=5 // pred_region
      %s295 = ssub.s32 %s15, 1
      %s296 = ssub.s32 1, %s24
      %s297 = smul.u32 %s25, %s296
      %s298 = smul.u32 16, %s297
      %p299 = scmp.lt.s32.totalorder %s298, 15
      %s300 = scalar_select %p299, %s298, 15
      %s301 = smul.addr %s300, 4
      %s302 = scalar_lea.vmem %s0, %s301
      %p303 = pneg %p57
      %p304 = pneg %p54
      %p305 = pneg %p78
      %p306 = pneg %p75
      %p307 = pneg %p99
      %p308 = pneg %p96
      %p309 = pneg %p120
      %p310 = pneg %p117
      %p311 = pneg %p141
      %p312 = pneg %p138
      %p313 = pneg %p162
      %p314 = pneg %p159
      %p315 = pneg %p183
      %p316 = pneg %p180
      %p317 = pneg %p211
      %p318 = pneg %p208
      %s319 = smul.u32 %s25, %s24
      %s320 = smul.u32 16, %s319
      %p321 = scmp.lt.s32.totalorder %s320, 15
      %s322 = scalar_select %p321, %s320, 15
      %s323 = smul.addr %s322, 8
      %s324 = scalar_lea.vmem %s7, %s323
      %p325 = pneg %p239
      %p326 = pneg %p236
      %s327 = smul.u32 %s25, %s24
      %s328 = smul.u32 16, %s327
      %p329 = scmp.lt.s32.totalorder %s328, 15
      %s330 = scalar_select %p329, %s328, 15
      %s331 = smul.addr %s330, 4
      %s332 = scalar_lea.vmem %s8, %s331
      %s333 = ssub.s32 1, %s24
      %s334 = smul.u32 %s25, %s333
      %s335 = smul.u32 16, %s334
      %p336 = scmp.lt.s32.totalorder %s335, 15
      %s337 = scalar_select %p336, %s335, 15
      %s338 = smul.addr %s337, 4
      %s339 = scalar_lea.vmem %s0, %s338
      %s340 = ssub.s32 1, %s24
      %s341 = smul.u32 %s25, %s340
      %s342 = smul.u32 16, %s341
      %s343 = smul.u32 %s25, %s24
      %s344 = smul.u32 16, %s343
      %p345 = scmp.lt.s32.totalorder %s344, 15
      %s346 = scalar_select %p345, %s344, 15
      %s347 = smul.addr %s346, 8
      %s348 = scalar_lea.vmem %s7, %s347
      %s349 = smul.u32 %s25, %s24
      %s350 = smul.u32 16, %s349
      %s351 = smul.u32 %s25, %s24
      %s352 = smul.u32 16, %s351
      %p353 = scmp.lt.s32.totalorder %s352, 15
      %s354 = scalar_select %p353, %s352, 15
      %s355 = smul.addr %s354, 4
      %s356 = scalar_lea.vmem %s8, %s355
      %s357 = smul.u32 %s25, %s24
      %s358 = smul.u32 16, %s357
      %s360 = smul.u32 %s25, 128
      %p361 = scmp.eq.s32.totalorder %s24, 0
      // Predicated region
      $region49: #{cnn_encode_layer.2} parent=47 // pred_check
        %p362 = pneg %p361
      $region50: #{cnn_encode_layer.2} parent=47 // pred_check_branch
        %364 = sbr.rel (%p362) target = $region52
      $region51: #{cnn_encode_layer.2} parent=47 // pred_region
        %v365 = vld [vmem:[%s339] sm:$0xf]
        %v366 = vld [vmem:[%s339 + $0x4] sm:$0xf]
        %v367 = vld [vmem:[%s339 + $0x8] sm:$0xf]
        %v368 = vld [vmem:[%s339 + $0xc] sm:$0xf]
        %v369 = vld [vmem:[%s339 + $0x10] sm:$0xf]
        %v370 = vld [vmem:[%s339 + $0x14] sm:$0xf]
        %v371 = vld [vmem:[%s339 + $0x18] sm:$0xf]
        %v372 = vld [vmem:[%s339 + $0x1c] sm:$0xf]
        %v373 = vld [vmem:[%s339 + $0x20] sm:$0xf]
        %v374 = vld [vmem:[%s339 + $0x24] sm:$0xf]
        %v375 = vld [vmem:[%s339 + $0x28] sm:$0xf]
        %v376 = vld [vmem:[%s339 + $0x2c] sm:$0xf]
        %v377 = vld [vmem:[%s339 + $0x30] sm:$0xf]
        %v378 = vld [vmem:[%s339 + $0x34] sm:$0xf]
        %v379 = vld [vmem:[%s339 + $0x38] sm:$0xf]
        %v380 = vld [vmem:[%s339 + $0x3c] sm:$0xf]
        %v381 = vld [vmem:[%s1] sm:$0xf]
        %v382 = vld [vmem:[%s1 + $0x4] sm:$0xf]
        %v383 = vld [vmem:[%s1 + $0x8] sm:$0xf]
        %v384 = vld [vmem:[%s1 + $0xc] sm:$0xf]
        %v385 = vld [vmem:[%s1 + $0x10] sm:$0xf]
        %v386 = vld [vmem:[%s1 + $0x14] sm:$0xf]
        %v387 = vld [vmem:[%s1 + $0x18] sm:$0xf]
        %v388 = vld [vmem:[%s1 + $0x1c] sm:$0xf]
        %v389 = vld [vmem:[%s1 + $0x20] sm:$0xf]
        %v390 = vld [vmem:[%s1 + $0x24] sm:$0xf]
        %v391 = vld [vmem:[%s1 + $0x28] sm:$0xf]
        %v392 = vld [vmem:[%s1 + $0x2c] sm:$0xf]
        %v393 = vld [vmem:[%s1 + $0x30] sm:$0xf]
        %v394 = vld [vmem:[%s1 + $0x34] sm:$0xf]
        %v395 = vld [vmem:[%s1 + $0x38] sm:$0xf]
        %v396 = vld [vmem:[%s1 + $0x3c] sm:$0xf]
        %v413 = vunpack.c.l.b16 %v365
        %v414 = vunpack.c.l.b16 %v366
        %v415 = vunpack.c.l.b16 %v367
        %v416 = vunpack.c.l.b16 %v368
        %v417 = vunpack.c.l.b16 %v369
        %v418 = vunpack.c.l.b16 %v370
        %v419 = vunpack.c.l.b16 %v371
        %v420 = vunpack.c.l.b16 %v372
        %v421 = vunpack.c.l.b16 %v373
        %v422 = vunpack.c.l.b16 %v374
        %v423 = vunpack.c.l.b16 %v375
        %v424 = vunpack.c.l.b16 %v376
        %v425 = vunpack.c.l.b16 %v377
        %v426 = vunpack.c.l.b16 %v378
        %v427 = vunpack.c.l.b16 %v379
        %v428 = vunpack.c.l.b16 %v380
        %v429 = vpack.c.b16 %v414, %v413
        %v430 = vpack.c.b16 %v416, %v415
        %v431 = vpack.c.b16 %v418, %v417
        %v432 = vpack.c.b16 %v420, %v419
        %v433 = vpack.c.b16 %v422, %v421
        %v434 = vpack.c.b16 %v424, %v423
        %v435 = vpack.c.b16 %v426, %v425
        %v436 = vpack.c.b16 %v428, %v427
        %v461 = vunpack.c.l.b16 %v381
        %v462 = vunpack.c.l.b16 %v382
        %v463 = vunpack.c.l.b16 %v383
        %v464 = vunpack.c.l.b16 %v384
        %v465 = vunpack.c.l.b16 %v385
        %v466 = vunpack.c.l.b16 %v386
        %v467 = vunpack.c.l.b16 %v387
        %v468 = vunpack.c.l.b16 %v388
        %v469 = vunpack.c.l.b16 %v389
        %v470 = vunpack.c.l.b16 %v390
        %v471 = vunpack.c.l.b16 %v391
        %v472 = vunpack.c.l.b16 %v392
        %v473 = vunpack.c.l.b16 %v393
        %v474 = vunpack.c.l.b16 %v394
        %v475 = vunpack.c.l.b16 %v395
        %v476 = vunpack.c.l.b16 %v396
        %v477 = vpack.c.b16 %v462, %v461
        %v478 = vpack.c.b16 %v464, %v463
        %v479 = vpack.c.b16 %v466, %v465
        %v480 = vpack.c.b16 %v468, %v467
        %v481 = vpack.c.b16 %v470, %v469
        %v482 = vpack.c.b16 %v472, %v471
        %v483 = vpack.c.b16 %v474, %v473
        %v484 = vpack.c.b16 %v476, %v475
        %493 = vmatprep.subr.bf16.mxu0 0
        %494 = vmatpush1.bf16.msra.mxu0 %v477
        %495 = vmatprep.subr.bf16.mxu0 0
        %496 = vmatpush1.bf16.msra.mxu0 %v478
        %497 = vmatprep.subr.bf16.mxu0 0
        %498 = vmatpush1.bf16.msra.mxu0 %v479
        %499 = vmatprep.subr.bf16.mxu0 0
        %500 = vmatpush1.bf16.msra.mxu0 %v480
        %501 = vmatprep.subr.bf16.mxu0 0
        %502 = vmatpush1.bf16.msra.mxu0 %v481
        %503 = vmatprep.subr.bf16.mxu0 0
        %504 = vmatpush1.bf16.msra.mxu0 %v482
        %505 = vmatprep.subr.bf16.mxu0 0
        %506 = vmatpush1.bf16.msra.mxu0 %v483
        %507 = vmatprep.subr.bf16.mxu0 0
        %508 = vmatpush1.bf16.msra.mxu0 %v484
        %509 = vmatprep.subr.bf16.mxu0 0
        %510 = vmatpush1.bf16.msra.mxu0 0
        %511 = vmatprep.subr.bf16.mxu0 0
        %512 = vmatpush1.bf16.msra.mxu0 0
        %513 = vmatprep.subr.bf16.mxu0 0
        %514 = vmatpush1.bf16.msra.mxu0 0
        %515 = vmatprep.subr.bf16.mxu0 0
        %516 = vmatpush1.bf16.msra.mxu0 0
        %517 = vmatprep.subr.bf16.mxu0 0
        %518 = vmatpush1.bf16.msra.mxu0 0
        %519 = vmatprep.subr.bf16.mxu0 0
        %520 = vmatpush1.bf16.msra.mxu0 0
        %521 = vmatprep.subr.bf16.mxu0 0
        %522 = vmatpush1.bf16.msra.mxu0 0
        %523 = vmatprep.subr.bf16.mxu0 0
        %524 = vmatpush1.bf16.msra.mxu0 0
        %525 = vmatprep.mubr.bf16.mxu0 0
        %526 = vmatmul.mubr.bf16.gmra.mrb[0].mxu0 %v429
        %v527 = vpop.f32.mrb[0].mxu0
        %v528 = vadd.f32 0.0, %v527
        %v529 = vpop.f32.mrb[0].mxu0
        %v530 = vpop.f32.mrb[0].mxu0
        %v531 = vadd.f32 0.0, %v530
        %v532 = vpop.f32.mrb[0].mxu0
        %533 = vmatprep.mubr.bf16.mxu0 0
        %534 = vmatmul.mubr.bf16.gmra.mrb[0].mxu0 %v430
        %v535 = vpop.f32.mrb[0].mxu0
        %v536 = vadd.f32 0.0, %v535
        %v537 = vpop.f32.mrb[0].mxu0
        %v538 = vpop.f32.mrb[0].mxu0
        %v539 = vadd.f32 0.0, %v538
        %v540 = vpop.f32.mrb[0].mxu0
        %541 = vmatprep.mubr.bf16.mxu0 0
        %542 = vmatmul.mubr.bf16.gmra.mrb[0].mxu0 %v431
        %v543 = vpop.f32.mrb[0].mxu0
        %v544 = vadd.f32 0.0, %v543
        %v545 = vpop.f32.mrb[0].mxu0
        %v546 = vpop.f32.mrb[0].mxu0
        %v547 = vadd.f32 0.0, %v546
        %v548 = vpop.f32.mrb[0].mxu0
        %549 = vmatprep.mubr.bf16.mxu0 0
        %550 = vmatmul.mubr.bf16.gmra.mrb[0].mxu0 %v432
        %v551 = vpop.f32.mrb[0].mxu0
        %v552 = vadd.f32 0.0, %v551
        %v553 = vpop.f32.mrb[0].mxu0
        %v554 = vpop.f32.mrb[0].mxu0
        %v555 = vadd.f32 0.0, %v554
        %v556 = vpop.f32.mrb[0].mxu0
        %557 = vmatprep.mubr.bf16.mxu0 0
        %558 = vmatmul.mubr.bf16.gmra.mrb[0].mxu0 %v433
        %v559 = vpop.f32.mrb[0].mxu0
        %v560 = vadd.f32 0.0, %v559
        %v561 = vpop.f32.mrb[0].mxu0
        %v562 = vpop.f32.mrb[0].mxu0
        %v563 = vadd.f32 0.0, %v562
        %v564 = vpop.f32.mrb[0].mxu0
        %565 = vmatprep.mubr.bf16.mxu0 0
        %566 = vmatmul.mubr.bf16.gmra.mrb[0].mxu0 %v434
        %v567 = vpop.f32.mrb[0].mxu0
        %v568 = vadd.f32 0.0, %v567
        %v569 = vpop.f32.mrb[0].mxu0
        %v570 = vpop.f32.mrb[0].mxu0
        %v571 = vadd.f32 0.0, %v570
        %v572 = vpop.f32.mrb[0].mxu0
        %573 = vmatprep.mubr.bf16.mxu0 0
        %574 = vmatmul.mubr.bf16.gmra.mrb[0].mxu0 %v435
        %v575 = vpop.f32.mrb[0].mxu0
        %v576 = vadd.f32 0.0, %v575
        %v577 = vpop.f32.mrb[0].mxu0
        %v578 = vpop.f32.mrb[0].mxu0
        %v579 = vadd.f32 0.0, %v578
        %v580 = vpop.f32.mrb[0].mxu0
        %581 = vmatprep.mubr.bf16.mxu0 0
        %582 = vmatmul.mubr.bf16.gmra.mrb[0].mxu0 %v436
        %v583 = vpop.f32.mrb[0].mxu0
        %v584 = vadd.f32 0.0, %v583
        %v585 = vpop.f32.mrb[0].mxu0
        %v586 = vpop.f32.mrb[0].mxu0
        %v587 = vadd.f32 0.0, %v586
        %v588 = vpop.f32.mrb[0].mxu0
        %589 = vdwg.mxu0
        %s590 = scalar_lea.vmem [#allocation2], %s360
        %vm591 = vcmask 64512
        %592 = vst.msk [vmem:[%s590] sm:$0xff] %vm591, %v528
        %593 = vst.msk [vmem:[%s590 + $0x8] sm:$0xff] %vm591, %v531
        %594 = vst.msk [vmem:[%s590 + $0x10] sm:$0xff] %vm591, %v536
        %595 = vst.msk [vmem:[%s590 + $0x18] sm:$0xff] %vm591, %v539
        %596 = vst.msk [vmem:[%s590 + $0x20] sm:$0xff] %vm591, %v544
        %597 = vst.msk [vmem:[%s590 + $0x28] sm:$0xff] %vm591, %v547
        %598 = vst.msk [vmem:[%s590 + $0x30] sm:$0xff] %vm591, %v552
        %599 = vst.msk [vmem:[%s590 + $0x38] sm:$0xff] %vm591, %v555
        %600 = vst.msk [vmem:[%s590 + $0x40] sm:$0xff] %vm591, %v560
        %601 = vst.msk [vmem:[%s590 + $0x48] sm:$0xff] %vm591, %v563
        %602 = vst.msk [vmem:[%s590 + $0x50] sm:$0xff] %vm591, %v568
        %603 = vst.msk [vmem:[%s590 + $0x58] sm:$0xff] %vm591, %v571
        %604 = vst.msk [vmem:[%s590 + $0x60] sm:$0xff] %vm591, %v576
        %605 = vst.msk [vmem:[%s590 + $0x68] sm:$0xff] %vm591, %v579
        %606 = vst.msk [vmem:[%s590 + $0x70] sm:$0xff] %vm591, %v584
        %607 = vst.msk [vmem:[%s590 + $0x78] sm:$0xff] %vm591, %v587
        %v608 = vld [vmem:[%s2] sm:$0xf]
        %v609 = vld [vmem:[%s2 + $0x4] sm:$0xf]
        %v610 = vld [vmem:[%s2 + $0x8] sm:$0xf]
        %v611 = vld [vmem:[%s2 + $0xc] sm:$0xf]
        %v612 = vld [vmem:[%s2 + $0x10] sm:$0xf]
        %v613 = vld [vmem:[%s2 + $0x14] sm:$0xf]
        %v614 = vld [vmem:[%s2 + $0x18] sm:$0xf]
        %v615 = vld [vmem:[%s2 + $0x1c] sm:$0xf]
        %v616 = vld [vmem:[%s2 + $0x20] sm:$0xf]
        %v617 = vld [vmem:[%s2 + $0x24] sm:$0xf]
        %v618 = vld [vmem:[%s2 + $0x28] sm:$0xf]
        %v619 = vld [vmem:[%s2 + $0x2c] sm:$0xf]
        %v620 = vld [vmem:[%s2 + $0x30] sm:$0xf]
        %v621 = vld [vmem:[%s2 + $0x34] sm:$0xf]
        %v622 = vld [vmem:[%s2 + $0x38] sm:$0xf]
        %v623 = vld [vmem:[%s2 + $0x3c] sm:$0xf]
        %v640 = vunpack.c.l.b16 %v608
        %v641 = vunpack.c.l.b16 %v609
        %v642 = vunpack.c.l.b16 %v610
        %v643 = vunpack.c.l.b16 %v611
        %v644 = vunpack.c.l.b16 %v612
        %v645 = vunpack.c.l.b16 %v613
        %v646 = vunpack.c.l.b16 %v614
        %v647 = vunpack.c.l.b16 %v615
        %v648 = vunpack.c.l.b16 %v616
        %v649 = vunpack.c.l.b16 %v617
        %v650 = vunpack.c.l.b16 %v618
        %v651 = vunpack.c.l.b16 %v619
        %v652 = vunpack.c.l.b16 %v620
        %v653 = vunpack.c.l.b16 %v621
        %v654 = vunpack.c.l.b16 %v622
        %v655 = vunpack.c.l.b16 %v623
        %v656 = vpack.c.b16 %v641, %v640
        %v657 = vpack.c.b16 %v643, %v642
        %v658 = vpack.c.b16 %v645, %v644
        %v659 = vpack.c.b16 %v647, %v646
        %v660 = vpack.c.b16 %v649, %v648
        %v661 = vpack.c.b16 %v651, %v650
        %v662 = vpack.c.b16 %v653, %v652
        %v663 = vpack.c.b16 %v655, %v654
        %672 = vmatprep.subr.bf16.mxu0 0
        %673 = vmatpush1.bf16.msra.mxu0 %v656
        %674 = vmatprep.subr.bf16.mxu0 0
        %675 = vmatpush1.bf16.msra.mxu0 %v657
        %676 = vmatprep.subr.bf16.mxu0 0
        %677 = vmatpush1.bf16.msra.mxu0 %v658
        %678 = vmatprep.subr.bf16.mxu0 0
        %679 = vmatpush1.bf16.msra.mxu0 %v659
        %680 = vmatprep.subr.bf16.mxu0 0
        %681 = vmatpush1.bf16.msra.mxu0 %v660
        %682 = vmatprep.subr.bf16.mxu0 0
        %683 = vmatpush1.bf16.msra.mxu0 %v661
        %684 = vmatprep.subr.bf16.mxu0 0
        %685 = vmatpush1.bf16.msra.mxu0 %v662
        %686 = vmatprep.subr.bf16.mxu0 0
        %687 = vmatpush1.bf16.msra.mxu0 %v663
        %688 = vmatprep.subr.bf16.mxu0 0
        %689 = vmatpush1.bf16.msra.mxu0 0
        %690 = vmatprep.subr.bf16.mxu0 0
        %691 = vmatpush1.bf16.msra.mxu0 0
        %692 = vmatprep.subr.bf16.mxu0 0
        %693 = vmatpush1.bf16.msra.mxu0 0
        %694 = vmatprep.subr.bf16.mxu0 0
        %695 = vmatpush1.bf16.msra.mxu0 0
        %696 = vmatprep.subr.bf16.mxu0 0
        %697 = vmatpush1.bf16.msra.mxu0 0
        %698 = vmatprep.subr.bf16.mxu0 0
        %699 = vmatpush1.bf16.msra.mxu0 0
        %700 = vmatprep.subr.bf16.mxu0 0
        %701 = vmatpush1.bf16.msra.mxu0 0
        %702 = vmatprep.subr.bf16.mxu0 0
        %703 = vmatpush1.bf16.msra.mxu0 0
        %704 = vmatprep.mubr.bf16.mxu0 0
        %705 = vmatmul.mubr.bf16.gmra.mrb[0].mxu0 %v429
        %v706 = vpop.f32.mrb[0].mxu0
        %v707 = vadd.f32 0.0, %v706
        %v708 = vpop.f32.mrb[0].mxu0
        %v709 = vpop.f32.mrb[0].mxu0
        %v710 = vadd.f32 0.0, %v709
        %v711 = vpop.f32.mrb[0].mxu0
        %712 = vmatprep.mubr.bf16.mxu0 0
        %713 = vmatmul.mubr.bf16.gmra.mrb[0].mxu0 %v430
        %v714 = vpop.f32.mrb[0].mxu0
        %v715 = vadd.f32 0.0, %v714
        %v716 = vpop.f32.mrb[0].mxu0
        %v717 = vpop.f32.mrb[0].mxu0
        %v718 = vadd.f32 0.0, %v717
        %v719 = vpop.f32.mrb[0].mxu0
        %720 = vmatprep.mubr.bf16.mxu0 0
        %721 = vmatmul.mubr.bf16.gmra.mrb[0].mxu0 %v431
        %v722 = vpop.f32.mrb[0].mxu0
        %v723 = vadd.f32 0.0, %v722
        %v724 = vpop.f32.mrb[0].mxu0
        %v725 = vpop.f32.mrb[0].mxu0
        %v726 = vadd.f32 0.0, %v725
        %v727 = vpop.f32.mrb[0].mxu0
        %728 = vmatprep.mubr.bf16.mxu0 0
        %729 = vmatmul.mubr.bf16.gmra.mrb[0].mxu0 %v432
        %v730 = vpop.f32.mrb[0].mxu0
        %v731 = vadd.f32 0.0, %v730
        %v732 = vpop.f32.mrb[0].mxu0
        %v733 = vpop.f32.mrb[0].mxu0
        %v734 = vadd.f32 0.0, %v733
        %v735 = vpop.f32.mrb[0].mxu0
        %736 = vmatprep.mubr.bf16.mxu0 0
        %737 = vmatmul.mubr.bf16.gmra.mrb[0].mxu0 %v433
        %v738 = vpop.f32.mrb[0].mxu0
        %v739 = vadd.f32 0.0, %v738
        %v740 = vpop.f32.mrb[0].mxu0
        %v741 = vpop.f32.mrb[0].mxu0
        %v742 = vadd.f32 0.0, %v741
        %v743 = vpop.f32.mrb[0].mxu0
        %744 = vmatprep.mubr.bf16.mxu0 0
        %745 = vmatmul.mubr.bf16.gmra.mrb[0].mxu0 %v434
        %v746 = vpop.f32.mrb[0].mxu0
        %v747 = vadd.f32 0.0, %v746
        %v748 = vpop.f32.mrb[0].mxu0
        %v749 = vpop.f32.mrb[0].mxu0
        %v750 = vadd.f32 0.0, %v749
        %v751 = vpop.f32.mrb[0].mxu0
        %752 = vmatprep.mubr.bf16.mxu0 0
        %753 = vmatmul.mubr.bf16.gmra.mrb[0].mxu0 %v435
        %v754 = vpop.f32.mrb[0].mxu0
        %v755 = vadd.f32 0.0, %v754
        %v756 = vpop.f32.mrb[0].mxu0
        %v757 = vpop.f32.mrb[0].mxu0
        %v758 = vadd.f32 0.0, %v757
        %v759 = vpop.f32.mrb[0].mxu0
        %760 = vmatprep.mubr.bf16.mxu0 0
        %761 = vmatmul.mubr.bf16.gmra.mrb[0].mxu0 %v436
        %v762 = vpop.f32.mrb[0].mxu0
        %v763 = vadd.f32 0.0, %v762
        %v764 = vpop.f32.mrb[0].mxu0
        %v765 = vpop.f32.mrb[0].mxu0
        %v766 = vadd.f32 0.0, %v765
        %v767 = vpop.f32.mrb[0].mxu0
        %768 = vdwg.mxu0
        %s769 = scalar_lea.vmem [#allocation3], %s360
        %770 = vst.msk [vmem:[%s769] sm:$0xff] %vm591, %v707
        %771 = vst.msk [vmem:[%s769 + $0x8] sm:$0xff] %vm591, %v710
        %772 = vst.msk [vmem:[%s769 + $0x10] sm:$0xff] %vm591, %v715
        %773 = vst.msk [vmem:[%s769 + $0x18] sm:$0xff] %vm591, %v718
        %774 = vst.msk [vmem:[%s769 + $0x20] sm:$0xff] %vm591, %v723
        %775 = vst.msk [vmem:[%s769 + $0x28] sm:$0xff] %vm591, %v726
        %776 = vst.msk [vmem:[%s769 + $0x30] sm:$0xff] %vm591, %v731
        %777 = vst.msk [vmem:[%s769 + $0x38] sm:$0xff] %vm591, %v734
        %778 = vst.msk [vmem:[%s769 + $0x40] sm:$0xff] %vm591, %v739
        %779 = vst.msk [vmem:[%s769 + $0x48] sm:$0xff] %vm591, %v742
        %780 = vst.msk [vmem:[%s769 + $0x50] sm:$0xff] %vm591, %v747
        %781 = vst.msk [vmem:[%s769 + $0x58] sm:$0xff] %vm591, %v750
        %782 = vst.msk [vmem:[%s769 + $0x60] sm:$0xff] %vm591, %v755
        %783 = vst.msk [vmem:[%s769 + $0x68] sm:$0xff] %vm591, %v758
        %784 = vst.msk [vmem:[%s769 + $0x70] sm:$0xff] %vm591, %v763
        %785 = vst.msk [vmem:[%s769 + $0x78] sm:$0xff] %vm591, %v766
      $region52: #{cnn_encode_layer.2} parent=47 // pred_fallthru
        _
      %p786 = scmp.eq.s32.totalorder %s24, 1
      // Predicated region
      $region53: #{cnn_encode_layer.2} parent=47 // pred_check
        %p787 = pneg %p786
      $region54: #{cnn_encode_layer.2} parent=47 // pred_check_branch
        %789 = sbr.rel (%p787) target = $region56
      $region55: #{cnn_encode_layer.2} parent=47 // pred_region
        %p790 = scmp.eq.s32.totalorder %s25, 0
        // Predicated region
        $region57: #{cnn_encode_layer.2} parent=55 // pred_check
          %p791 = pneg %p790
        $region58: #{cnn_encode_layer.2} parent=55 // pred_check_branch
          %793 = sbr.rel (%p791) target = $region60
        $region59: #{cnn_encode_layer.2} parent=55 // pred_region
          %v794 = vld [vmem:[#allocation2] sm:$0xff]
          %v795 = vld [vmem:[#allocation2 + $0x8] sm:$0xff]
          %v796 = vld [vmem:[#allocation2 + $0x10] sm:$0xff]
          %v797 = vld [vmem:[#allocation2 + $0x18] sm:$0xff]
          %v798 = vld [vmem:[#allocation2 + $0x20] sm:$0xff]
          %v799 = vld [vmem:[#allocation2 + $0x28] sm:$0xff]
          %v800 = vld [vmem:[#allocation2 + $0x30] sm:$0xff]
          %v801 = vld [vmem:[#allocation2 + $0x38] sm:$0xff]
          %v802 = vld [vmem:[#allocation2 + $0x40] sm:$0xff]
          %v803 = vld [vmem:[#allocation2 + $0x48] sm:$0xff]
          %v804 = vld [vmem:[#allocation2 + $0x50] sm:$0xff]
          %v805 = vld [vmem:[#allocation2 + $0x58] sm:$0xff]
          %v806 = vld [vmem:[#allocation2 + $0x60] sm:$0xff]
          %v807 = vld [vmem:[#allocation2 + $0x68] sm:$0xff]
          %v808 = vld [vmem:[#allocation2 + $0x70] sm:$0xff]
          %v809 = vld [vmem:[#allocation2 + $0x78] sm:$0xff]
          %vm810 = vcmask 64512
          %v811 = vsel %vm810, %v794, 0.0
          %v812 = vsel %vm810, %v795, 0.0
          %v813 = vadd.f32 %v811, %v812
          %v814 = vsel %vm810, %v796, 0.0
          %v815 = vadd.f32 %v813, %v814
          %v816 = vsel %vm810, %v797, 0.0
          %v817 = vadd.f32 %v815, %v816
          %v818 = vsel %vm810, %v798, 0.0
          %v819 = vadd.f32 %v817, %v818
          %v820 = vsel %vm810, %v799, 0.0
          %v821 = vadd.f32 %v819, %v820
          %v822 = vsel %vm810, %v800, 0.0
          %v823 = vadd.f32 %v821, %v822
          %v824 = vsel %vm810, %v801, 0.0
          %v825 = vadd.f32 %v823, %v824
          %v826 = vsel %vm810, %v802, 0.0
          %v827 = vadd.f32 %v825, %v826
          %v828 = vsel %vm810, %v803, 0.0
          %v829 = vadd.f32 %v827, %v828
          %v830 = vsel %vm810, %v804, 0.0
          %v831 = vadd.f32 %v829, %v830
          %v832 = vsel %vm810, %v805, 0.0
          %v833 = vadd.f32 %v831, %v832
          %v834 = vsel %vm810, %v806, 0.0
          %v835 = vadd.f32 %v833, %v834
          %v836 = vsel %vm810, %v807, 0.0
          %v837 = vadd.f32 %v835, %v836
          %v838 = vsel %vm810, %v808, 0.0
          %v839 = vadd.f32 %v837, %v838
          %v840 = vsel %vm810, %v809, 0.0
          %v841 = vadd.f32 %v839, %v840
          %v842 = vrot.slane %v841, 4
          %v843 = vadd.f32 %v841, %v842
          %v844 = vrot.slane %v843, 2
          %v845 = vadd.f32 %v843, %v844
          %v846 = vrot.slane %v845, 1
          %v847 = vadd.f32 %v845, %v846
          %v848 = vrcp.pop 128.0
          %v849 = vmul.f32 %v847, %v848
          %v850 = vsub.f32 %v794, %v849
          %v851 = vsub.f32 %v795, %v849
          %v852 = vsub.f32 %v796, %v849
          %v853 = vsub.f32 %v797, %v849
          %v854 = vsub.f32 %v798, %v849
          %v855 = vsub.f32 %v799, %v849
          %v856 = vsub.f32 %v800, %v849
          %v857 = vsub.f32 %v801, %v849
          %v858 = vsub.f32 %v802, %v849
          %v859 = vsub.f32 %v803, %v849
          %v860 = vsub.f32 %v804, %v849
          %v861 = vsub.f32 %v805, %v849
          %v862 = vsub.f32 %v806, %v849
          %v863 = vsub.f32 %v807, %v849
          %v864 = vsub.f32 %v808, %v849
          %v865 = vsub.f32 %v809, %v849
          %v866 = vmul.f32 %v850, %v850
          %v867 = vmul.f32 %v851, %v851
          %v868 = vmul.f32 %v852, %v852
          %v869 = vmul.f32 %v853, %v853
          %v870 = vmul.f32 %v854, %v854
          %v871 = vmul.f32 %v855, %v855
          %v872 = vmul.f32 %v856, %v856
          %v873 = vmul.f32 %v857, %v857
          %v874 = vmul.f32 %v858, %v858
          %v875 = vmul.f32 %v859, %v859
          %v876 = vmul.f32 %v860, %v860
          %v877 = vmul.f32 %v861, %v861
          %v878 = vmul.f32 %v862, %v862
          %v879 = vmul.f32 %v863, %v863
          %v880 = vmul.f32 %v864, %v864
          %v881 = vmul.f32 %v865, %v865
          %v882 = vsel %vm810, %v866, 0.0
          %v883 = vsel %vm810, %v867, 0.0
          %v884 = vadd.f32 %v882, %v883
          %v885 = vsel %vm810, %v868, 0.0
          %v886 = vadd.f32 %v884, %v885
          %v887 = vsel %vm810, %v869, 0.0
          %v888 = vadd.f32 %v886, %v887
          %v889 = vsel %vm810, %v870, 0.0
          %v890 = vadd.f32 %v888, %v889
          %v891 = vsel %vm810, %v871, 0.0
          %v892 = vadd.f32 %v890, %v891
          %v893 = vsel %vm810, %v872, 0.0
          %v894 = vadd.f32 %v892, %v893
          %v895 = vsel %vm810, %v873, 0.0
          %v896 = vadd.f32 %v894, %v895
          %v897 = vsel %vm810, %v874, 0.0
          %v898 = vadd.f32 %v896, %v897
          %v899 = vsel %vm810, %v875, 0.0
          %v900 = vadd.f32 %v898, %v899
          %v901 = vsel %vm810, %v876, 0.0
          %v902 = vadd.f32 %v900, %v901
          %v903 = vsel %vm810, %v877, 0.0
          %v904 = vadd.f32 %v902, %v903
          %v905 = vsel %vm810, %v878, 0.0
          %v906 = vadd.f32 %v904, %v905
          %v907 = vsel %vm810, %v879, 0.0
          %v908 = vadd.f32 %v906, %v907
          %v909 = vsel %vm810, %v880, 0.0
          %v910 = vadd.f32 %v908, %v909
          %v911 = vsel %vm810, %v881, 0.0
          %v912 = vadd.f32 %v910, %v911
          %v913 = vrot.slane %v912, 4
          %v914 = vadd.f32 %v912, %v913
          %v915 = vrot.slane %v914, 2
          %v916 = vadd.f32 %v914, %v915
          %v917 = vrot.slane %v916, 1
          %v918 = vadd.f32 %v916, %v917
          %v919 = vmul.f32 %v918, %v848
          %v920 = vld [vmem:[%s3] sm:$0x1]
          %v921 = vadd.f32 %v919, 1e-05
          %v922 = vrsqrt.pop %v921
          %v923 = vmul.f32 %v920, %v922
          %v924 = vld [vmem:[%s4] sm:$0x1]
          %v925 = vmul.f32 %v849, %v923
          %v926 = vsub.f32 %v924, %v925
          %v927 = vld [vmem:[#allocation3] sm:$0xff]
          %v928 = vld [vmem:[#allocation3 + $0x8] sm:$0xff]
          %v929 = vld [vmem:[#allocation3 + $0x10] sm:$0xff]
          %v930 = vld [vmem:[#allocation3 + $0x18] sm:$0xff]
          %v931 = vld [vmem:[#allocation3 + $0x20] sm:$0xff]
          %v932 = vld [vmem:[#allocation3 + $0x28] sm:$0xff]
          %v933 = vld [vmem:[#allocation3 + $0x30] sm:$0xff]
          %v934 = vld [vmem:[#allocation3 + $0x38] sm:$0xff]
          %v935 = vld [vmem:[#allocation3 + $0x40] sm:$0xff]
          %v936 = vld [vmem:[#allocation3 + $0x48] sm:$0xff]
          %v937 = vld [vmem:[#allocation3 + $0x50] sm:$0xff]
          %v938 = vld [vmem:[#allocation3 + $0x58] sm:$0xff]
          %v939 = vld [vmem:[#allocation3 + $0x60] sm:$0xff]
          %v940 = vld [vmem:[#allocation3 + $0x68] sm:$0xff]
          %v941 = vld [vmem:[#allocation3 + $0x70] sm:$0xff]
          %v942 = vld [vmem:[#allocation3 + $0x78] sm:$0xff]
          %v943 = vsel %vm810, %v927, 0.0
          %v944 = vsel %vm810, %v928, 0.0
          %v945 = vadd.f32 %v943, %v944
          %v946 = vsel %vm810, %v929, 0.0
          %v947 = vadd.f32 %v945, %v946
          %v948 = vsel %vm810, %v930, 0.0
          %v949 = vadd.f32 %v947, %v948
          %v950 = vsel %vm810, %v931, 0.0
          %v951 = vadd.f32 %v949, %v950
          %v952 = vsel %vm810, %v932, 0.0
          %v953 = vadd.f32 %v951, %v952
          %v954 = vsel %vm810, %v933, 0.0
          %v955 = vadd.f32 %v953, %v954
          %v956 = vsel %vm810, %v934, 0.0
          %v957 = vadd.f32 %v955, %v956
          %v958 = vsel %vm810, %v935, 0.0
          %v959 = vadd.f32 %v957, %v958
          %v960 = vsel %vm810, %v936, 0.0
          %v961 = vadd.f32 %v959, %v960
          %v962 = vsel %vm810, %v937, 0.0
          %v963 = vadd.f32 %v961, %v962
          %v964 = vsel %vm810, %v938, 0.0
          %v965 = vadd.f32 %v963, %v964
          %v966 = vsel %vm810, %v939, 0.0
          %v967 = vadd.f32 %v965, %v966
          %v968 = vsel %vm810, %v940, 0.0
          %v969 = vadd.f32 %v967, %v968
          %v970 = vsel %vm810, %v941, 0.0
          %v971 = vadd.f32 %v969, %v970
          %v972 = vsel %vm810, %v942, 0.0
          %v973 = vadd.f32 %v971, %v972
          %v974 = vrot.slane %v973, 4
          %v975 = vadd.f32 %v973, %v974
          %v976 = vrot.slane %v975, 2
          %v977 = vadd.f32 %v975, %v976
          %v978 = vrot.slane %v977, 1
          %v979 = vadd.f32 %v977, %v978
          %v980 = vmul.f32 %v979, %v848
          %v981 = vsub.f32 %v927, %v980
          %v982 = vsub.f32 %v928, %v980
          %v983 = vsub.f32 %v929, %v980
          %v984 = vsub.f32 %v930, %v980
          %v985 = vsub.f32 %v931, %v980
          %v986 = vsub.f32 %v932, %v980
          %v987 = vsub.f32 %v933, %v980
          %v988 = vsub.f32 %v934, %v980
          %v989 = vsub.f32 %v935, %v980
          %v990 = vsub.f32 %v936, %v980
          %v991 = vsub.f32 %v937, %v980
          %v992 = vsub.f32 %v938, %v980
          %v993 = vsub.f32 %v939, %v980
          %v994 = vsub.f32 %v940, %v980
          %v995 = vsub.f32 %v941, %v980
          %v996 = vsub.f32 %v942, %v980
          %v997 = vmul.f32 %v981, %v981
          %v998 = vmul.f32 %v982, %v982
          %v999 = vmul.f32 %v983, %v983
          %v1000 = vmul.f32 %v984, %v984
          %v1001 = vmul.f32 %v985, %v985
          %v1002 = vmul.f32 %v986, %v986
          %v1003 = vmul.f32 %v987, %v987
          %v1004 = vmul.f32 %v988, %v988
          %v1005 = vmul.f32 %v989, %v989
          %v1006 = vmul.f32 %v990, %v990
          %v1007 = vmul.f32 %v991, %v991
          %v1008 = vmul.f32 %v992, %v992
          %v1009 = vmul.f32 %v993, %v993
          %v1010 = vmul.f32 %v994, %v994
          %v1011 = vmul.f32 %v995, %v995
          %v1012 = vmul.f32 %v996, %v996
          %v1013 = vsel %vm810, %v997, 0.0
          %v1014 = vsel %vm810, %v998, 0.0
          %v1015 = vadd.f32 %v1013, %v1014
          %v1016 = vsel %vm810, %v999, 0.0
          %v1017 = vadd.f32 %v1015, %v1016
          %v1018 = vsel %vm810, %v1000, 0.0
          %v1019 = vadd.f32 %v1017, %v1018
          %v1020 = vsel %vm810, %v1001, 0.0
          %v1021 = vadd.f32 %v1019, %v1020
          %v1022 = vsel %vm810, %v1002, 0.0
          %v1023 = vadd.f32 %v1021, %v1022
          %v1024 = vsel %vm810, %v1003, 0.0
          %v1025 = vadd.f32 %v1023, %v1024
          %v1026 = vsel %vm810, %v1004, 0.0
          %v1027 = vadd.f32 %v1025, %v1026
          %v1028 = vsel %vm810, %v1005, 0.0
          %v1029 = vadd.f32 %v1027, %v1028
          %v1030 = vsel %vm810, %v1006, 0.0
          %v1031 = vadd.f32 %v1029, %v1030
          %v1032 = vsel %vm810, %v1007, 0.0
          %v1033 = vadd.f32 %v1031, %v1032
          %v1034 = vsel %vm810, %v1008, 0.0
          %v1035 = vadd.f32 %v1033, %v1034
          %v1036 = vsel %vm810, %v1009, 0.0
          %v1037 = vadd.f32 %v1035, %v1036
          %v1038 = vsel %vm810, %v1010, 0.0
          %v1039 = vadd.f32 %v1037, %v1038
          %v1040 = vsel %vm810, %v1011, 0.0
          %v1041 = vadd.f32 %v1039, %v1040
          %v1042 = vsel %vm810, %v1012, 0.0
          %v1043 = vadd.f32 %v1041, %v1042
          %v1044 = vrot.slane %v1043, 4
          %v1045 = vadd.f32 %v1043, %v1044
          %v1046 = vrot.slane %v1045, 2
          %v1047 = vadd.f32 %v1045, %v1046
          %v1048 = vrot.slane %v1047, 1
          %v1049 = vadd.f32 %v1047, %v1048
          %v1050 = vmul.f32 %v1049, %v848
          %v1051 = vld [vmem:[%s5] sm:$0x1]
          %v1052 = vadd.f32 %v1050, 1e-05
          %v1053 = vrsqrt.pop %v1052
          %v1054 = vmul.f32 %v1051, %v1053
          %v1055 = vld [vmem:[%s6] sm:$0x1]
          %v1056 = vmul.f32 %v980, %v1054
          %v1057 = vsub.f32 %v1055, %v1056
          %vm1058 = vcmask 57344
          %1059 = vst.msk [vmem:[#allocation4] sm:$0x1] %vm1058, %v923
          %1060 = vst.msk [vmem:[#allocation4 + $0x1] sm:$0x1] %vm1058, %v926
          %1061 = vst.msk [vmem:[#allocation4 + $0x2] sm:$0x1] %vm1058, %v1054
          %1062 = vst.msk [vmem:[#allocation4 + $0x3] sm:$0x1] %vm1058, %v1057
        $region60: #{cnn_encode_layer.2} parent=55 // pred_fallthru
          _
        %s1063 = scalar_lea.vmem [#allocation2], %s360
        %v1064 = vld [vmem:[%s1063] sm:$0xff]
        %v1065 = vld [vmem:[%s1063 + $0x8] sm:$0xff]
        %v1066 = vld [vmem:[%s1063 + $0x10] sm:$0xff]
        %v1067 = vld [vmem:[%s1063 + $0x18] sm:$0xff]
        %v1068 = vld [vmem:[%s1063 + $0x20] sm:$0xff]
        %v1069 = vld [vmem:[%s1063 + $0x28] sm:$0xff]
        %v1070 = vld [vmem:[%s1063 + $0x30] sm:$0xff]
        %v1071 = vld [vmem:[%s1063 + $0x38] sm:$0xff]
        %v1072 = vld [vmem:[%s1063 + $0x40] sm:$0xff]
        %v1073 = vld [vmem:[%s1063 + $0x48] sm:$0xff]
        %v1074 = vld [vmem:[%s1063 + $0x50] sm:$0xff]
        %v1075 = vld [vmem:[%s1063 + $0x58] sm:$0xff]
        %v1076 = vld [vmem:[%s1063 + $0x60] sm:$0xff]
        %v1077 = vld [vmem:[%s1063 + $0x68] sm:$0xff]
        %v1078 = vld [vmem:[%s1063 + $0x70] sm:$0xff]
        %v1079 = vld [vmem:[%s1063 + $0x78] sm:$0xff]
        %v1080 = vld [vmem:[#allocation4] sm:$0x1]
        %v1081 = vlaneseq
        %v1082 = vshrl.u32 %v1081, 7
        %v1083 = vsub.s32 0, %v1082
        %v1084 = vrot.slane %v1080, %v1083
        %v1085 = vmul.f32 %v1064, %v1084
        %v1086 = vmul.f32 %v1065, %v1084
        %v1087 = vmul.f32 %v1066, %v1084
        %v1088 = vmul.f32 %v1067, %v1084
        %v1089 = vmul.f32 %v1068, %v1084
        %v1090 = vmul.f32 %v1069, %v1084
        %v1091 = vmul.f32 %v1070, %v1084
        %v1092 = vmul.f32 %v1071, %v1084
        %v1093 = vmul.f32 %v1072, %v1084
        %v1094 = vmul.f32 %v1073, %v1084
        %v1095 = vmul.f32 %v1074, %v1084
        %v1096 = vmul.f32 %v1075, %v1084
        %v1097 = vmul.f32 %v1076, %v1084
        %v1098 = vmul.f32 %v1077, %v1084
        %v1099 = vmul.f32 %v1078, %v1084
        %v1100 = vmul.f32 %v1079, %v1084
        %v1101 = vld [vmem:[#allocation4 + $0x1] sm:$0x1]
        %v1102 = vlaneseq
        %v1103 = vshrl.u32 %v1102, 7
        %v1104 = vsub.s32 0, %v1103
        %v1105 = vrot.slane %v1101, %v1104
        %v1106 = vadd.f32 %v1085, %v1105
        %v1107 = vadd.f32 %v1086, %v1105
        %v1108 = vadd.f32 %v1087, %v1105
        %v1109 = vadd.f32 %v1088, %v1105
        %v1110 = vadd.f32 %v1089, %v1105
        %v1111 = vadd.f32 %v1090, %v1105
        %v1112 = vadd.f32 %v1091, %v1105
        %v1113 = vadd.f32 %v1092, %v1105
        %v1114 = vadd.f32 %v1093, %v1105
        %v1115 = vadd.f32 %v1094, %v1105
        %v1116 = vadd.f32 %v1095, %v1105
        %v1117 = vadd.f32 %v1096, %v1105
        %v1118 = vadd.f32 %v1097, %v1105
        %v1119 = vadd.f32 %v1098, %v1105
        %v1120 = vadd.f32 %v1099, %v1105
        %v1121 = vadd.f32 %v1100, %v1105
        %s1122 = scalar_lea.vmem [#allocation3], %s360
        %v1123 = vld [vmem:[%s1122] sm:$0xff]
        %v1124 = vld [vmem:[%s1122 + $0x8] sm:$0xff]
        %v1125 = vld [vmem:[%s1122 + $0x10] sm:$0xff]
        %v1126 = vld [vmem:[%s1122 + $0x18] sm:$0xff]
        %v1127 = vld [vmem:[%s1122 + $0x20] sm:$0xff]
        %v1128 = vld [vmem:[%s1122 + $0x28] sm:$0xff]
        %v1129 = vld [vmem:[%s1122 + $0x30] sm:$0xff]
        %v1130 = vld [vmem:[%s1122 + $0x38] sm:$0xff]
        %v1131 = vld [vmem:[%s1122 + $0x40] sm:$0xff]
        %v1132 = vld [vmem:[%s1122 + $0x48] sm:$0xff]
        %v1133 = vld [vmem:[%s1122 + $0x50] sm:$0xff]
        %v1134 = vld [vmem:[%s1122 + $0x58] sm:$0xff]
        %v1135 = vld [vmem:[%s1122 + $0x60] sm:$0xff]
        %v1136 = vld [vmem:[%s1122 + $0x68] sm:$0xff]
        %v1137 = vld [vmem:[%s1122 + $0x70] sm:$0xff]
        %v1138 = vld [vmem:[%s1122 + $0x78] sm:$0xff]
        %v1139 = vld [vmem:[#allocation4 + $0x2] sm:$0x1]
        %v1140 = vlaneseq
        %v1141 = vshrl.u32 %v1140, 7
        %v1142 = vsub.s32 0, %v1141
        %v1143 = vrot.slane %v1139, %v1142
        %v1144 = vmul.f32 %v1123, %v1143
        %v1145 = vmul.f32 %v1124, %v1143
        %v1146 = vmul.f32 %v1125, %v1143
        %v1147 = vmul.f32 %v1126, %v1143
        %v1148 = vmul.f32 %v1127, %v1143
        %v1149 = vmul.f32 %v1128, %v1143
        %v1150 = vmul.f32 %v1129, %v1143
        %v1151 = vmul.f32 %v1130, %v1143
        %v1152 = vmul.f32 %v1131, %v1143
        %v1153 = vmul.f32 %v1132, %v1143
        %v1154 = vmul.f32 %v1133, %v1143
        %v1155 = vmul.f32 %v1134, %v1143
        %v1156 = vmul.f32 %v1135, %v1143
        %v1157 = vmul.f32 %v1136, %v1143
        %v1158 = vmul.f32 %v1137, %v1143
        %v1159 = vmul.f32 %v1138, %v1143
        %v1160 = vld [vmem:[#allocation4 + $0x3] sm:$0x1]
        %v1161 = vlaneseq
        %v1162 = vshrl.u32 %v1161, 7
        %v1163 = vsub.s32 0, %v1162
        %v1164 = vrot.slane %v1160, %v1163
        %v1165 = vadd.f32 %v1144, %v1164
        %v1166 = vadd.f32 %v1145, %v1164
        %v1167 = vadd.f32 %v1146, %v1164
        %v1168 = vadd.f32 %v1147, %v1164
        %v1169 = vadd.f32 %v1148, %v1164
        %v1170 = vadd.f32 %v1149, %v1164
        %v1171 = vadd.f32 %v1150, %v1164
        %v1172 = vadd.f32 %v1151, %v1164
        %v1173 = vadd.f32 %v1152, %v1164
        %v1174 = vadd.f32 %v1153, %v1164
        %v1175 = vadd.f32 %v1154, %v1164
        %v1176 = vadd.f32 %v1155, %v1164
        %v1177 = vadd.f32 %v1156, %v1164
        %v1178 = vadd.f32 %v1157, %v1164
        %v1179 = vadd.f32 %v1158, %v1164
        %v1180 = vadd.f32 %v1159, %v1164
        %v1181 = vmul.f32 %v1106, 0.01
        %v1182 = vmul.f32 %v1107, 0.01
        %v1183 = vmul.f32 %v1108, 0.01
        %v1184 = vmul.f32 %v1109, 0.01
        %v1185 = vmul.f32 %v1110, 0.01
        %v1186 = vmul.f32 %v1111, 0.01
        %v1187 = vmul.f32 %v1112, 0.01
        %v1188 = vmul.f32 %v1113, 0.01
        %v1189 = vmul.f32 %v1114, 0.01
        %v1190 = vmul.f32 %v1115, 0.01
        %v1191 = vmul.f32 %v1116, 0.01
        %v1192 = vmul.f32 %v1117, 0.01
        %v1193 = vmul.f32 %v1118, 0.01
        %v1194 = vmul.f32 %v1119, 0.01
        %v1195 = vmul.f32 %v1120, 0.01
        %v1196 = vmul.f32 %v1121, 0.01
        %v1197 = vmax.f32 %v1106, %v1181
        %v1198 = vmax.f32 %v1107, %v1182
        %v1199 = vmax.f32 %v1108, %v1183
        %v1200 = vmax.f32 %v1109, %v1184
        %v1201 = vmax.f32 %v1110, %v1185
        %v1202 = vmax.f32 %v1111, %v1186
        %v1203 = vmax.f32 %v1112, %v1187
        %v1204 = vmax.f32 %v1113, %v1188
        %v1205 = vmax.f32 %v1114, %v1189
        %v1206 = vmax.f32 %v1115, %v1190
        %v1207 = vmax.f32 %v1116, %v1191
        %v1208 = vmax.f32 %v1117, %v1192
        %v1209 = vmax.f32 %v1118, %v1193
        %v1210 = vmax.f32 %v1119, %v1194
        %v1211 = vmax.f32 %v1120, %v1195
        %v1212 = vmax.f32 %v1121, %v1196
        %vm1213 = vcmask 64512
        %1214 = vst.msk [vmem:[%s348] sm:$0xff] %vm1213, %v1197
        %1215 = vst.msk [vmem:[%s348 + $0x8] sm:$0xff] %vm1213, %v1198
        %1216 = vst.msk [vmem:[%s348 + $0x10] sm:$0xff] %vm1213, %v1199
        %1217 = vst.msk [vmem:[%s348 + $0x18] sm:$0xff] %vm1213, %v1200
        %1218 = vst.msk [vmem:[%s348 + $0x20] sm:$0xff] %vm1213, %v1201
        %1219 = vst.msk [vmem:[%s348 + $0x28] sm:$0xff] %vm1213, %v1202
        %1220 = vst.msk [vmem:[%s348 + $0x30] sm:$0xff] %vm1213, %v1203
        %1221 = vst.msk [vmem:[%s348 + $0x38] sm:$0xff] %vm1213, %v1204
        %1222 = vst.msk [vmem:[%s348 + $0x40] sm:$0xff] %vm1213, %v1205
        %1223 = vst.msk [vmem:[%s348 + $0x48] sm:$0xff] %vm1213, %v1206
        %1224 = vst.msk [vmem:[%s348 + $0x50] sm:$0xff] %vm1213, %v1207
        %1225 = vst.msk [vmem:[%s348 + $0x58] sm:$0xff] %vm1213, %v1208
        %1226 = vst.msk [vmem:[%s348 + $0x60] sm:$0xff] %vm1213, %v1209
        %1227 = vst.msk [vmem:[%s348 + $0x68] sm:$0xff] %vm1213, %v1210
        %1228 = vst.msk [vmem:[%s348 + $0x70] sm:$0xff] %vm1213, %v1211
        %1229 = vst.msk [vmem:[%s348 + $0x78] sm:$0xff] %vm1213, %v1212
        %v1230 = vmul.f32 %v1165, 0.01
        %v1231 = vmul.f32 %v1166, 0.01
        %v1232 = vmul.f32 %v1167, 0.01
        %v1233 = vmul.f32 %v1168, 0.01
        %v1234 = vmul.f32 %v1169, 0.01
        %v1235 = vmul.f32 %v1170, 0.01
        %v1236 = vmul.f32 %v1171, 0.01
        %v1237 = vmul.f32 %v1172, 0.01
        %v1238 = vmul.f32 %v1173, 0.01
        %v1239 = vmul.f32 %v1174, 0.01
        %v1240 = vmul.f32 %v1175, 0.01
        %v1241 = vmul.f32 %v1176, 0.01
        %v1242 = vmul.f32 %v1177, 0.01
        %v1243 = vmul.f32 %v1178, 0.01
        %v1244 = vmul.f32 %v1179, 0.01
        %v1245 = vmul.f32 %v1180, 0.01
        %v1246 = vmax.f32 %v1165, %v1230
        %v1247 = vmax.f32 %v1166, %v1231
        %v1248 = vmax.f32 %v1167, %v1232
        %v1249 = vmax.f32 %v1168, %v1233
        %v1250 = vmax.f32 %v1169, %v1234
        %v1251 = vmax.f32 %v1170, %v1235
        %v1252 = vmax.f32 %v1171, %v1236
        %v1253 = vmax.f32 %v1172, %v1237
        %v1254 = vmax.f32 %v1173, %v1238
        %v1255 = vmax.f32 %v1174, %v1239
        %v1256 = vmax.f32 %v1175, %v1240
        %v1257 = vmax.f32 %v1176, %v1241
        %v1258 = vmax.f32 %v1177, %v1242
        %v1259 = vmax.f32 %v1178, %v1243
        %v1260 = vmax.f32 %v1179, %v1244
        %v1261 = vmax.f32 %v1180, %v1245
        %v1262 = vpack.c.bf16 %v1247, %v1246
        %v1263 = vpack.c.bf16 %v1249, %v1248
        %v1264 = vpack.c.bf16 %v1251, %v1250
        %v1265 = vpack.c.bf16 %v1253, %v1252
        %v1266 = vpack.c.bf16 %v1255, %v1254
        %v1267 = vpack.c.bf16 %v1257, %v1256
        %v1268 = vpack.c.bf16 %v1259, %v1258
        %v1269 = vpack.c.bf16 %v1261, %v1260
        %v1278 = vunpack.c.l.b16 %v1262
        %v1279 = vunpack.c.h.b16 %v1262
        %v1280 = vunpack.c.l.b16 %v1263
        %v1281 = vunpack.c.h.b16 %v1263
        %v1282 = vunpack.c.l.b16 %v1264
        %v1283 = vunpack.c.h.b16 %v1264
        %v1284 = vunpack.c.l.b16 %v1265
        %v1285 = vunpack.c.h.b16 %v1265
        %v1286 = vunpack.c.l.b16 %v1266
        %v1287 = vunpack.c.h.b16 %v1266
        %v1288 = vunpack.c.l.b16 %v1267
        %v1289 = vunpack.c.h.b16 %v1267
        %v1290 = vunpack.c.l.b16 %v1268
        %v1291 = vunpack.c.h.b16 %v1268
        %v1292 = vunpack.c.l.b16 %v1269
        %v1293 = vunpack.c.h.b16 %v1269
        %v1294 = vpack.c.b16 %v1278, %v1278
        %v1295 = vpack.c.b16 %v1279, %v1279
        %v1296 = vpack.c.b16 %v1280, %v1280
        %v1297 = vpack.c.b16 %v1281, %v1281
        %v1298 = vpack.c.b16 %v1282, %v1282
        %v1299 = vpack.c.b16 %v1283, %v1283
        %v1300 = vpack.c.b16 %v1284, %v1284
        %v1301 = vpack.c.b16 %v1285, %v1285
        %v1302 = vpack.c.b16 %v1286, %v1286
        %v1303 = vpack.c.b16 %v1287, %v1287
        %v1304 = vpack.c.b16 %v1288, %v1288
        %v1305 = vpack.c.b16 %v1289, %v1289
        %v1306 = vpack.c.b16 %v1290, %v1290
        %v1307 = vpack.c.b16 %v1291, %v1291
        %v1308 = vpack.c.b16 %v1292, %v1292
        %v1309 = vpack.c.b16 %v1293, %v1293
        %vm1326 = vcmask 60416
        %1327 = vst.msk [vmem:[%s356] sm:$0xf] %vm1326, %v1294
        %1328 = vst.msk [vmem:[%s356 + $0x4] sm:$0xf] %vm1326, %v1295
        %1329 = vst.msk [vmem:[%s356 + $0x8] sm:$0xf] %vm1326, %v1296
        %1330 = vst.msk [vmem:[%s356 + $0xc] sm:$0xf] %vm1326, %v1297
        %1331 = vst.msk [vmem:[%s356 + $0x10] sm:$0xf] %vm1326, %v1298
        %1332 = vst.msk [vmem:[%s356 + $0x14] sm:$0xf] %vm1326, %v1299
        %1333 = vst.msk [vmem:[%s356 + $0x18] sm:$0xf] %vm1326, %v1300
        %1334 = vst.msk [vmem:[%s356 + $0x1c] sm:$0xf] %vm1326, %v1301
        %1335 = vst.msk [vmem:[%s356 + $0x20] sm:$0xf] %vm1326, %v1302
        %1336 = vst.msk [vmem:[%s356 + $0x24] sm:$0xf] %vm1326, %v1303
        %1337 = vst.msk [vmem:[%s356 + $0x28] sm:$0xf] %vm1326, %v1304
        %1338 = vst.msk [vmem:[%s356 + $0x2c] sm:$0xf] %vm1326, %v1305
        %1339 = vst.msk [vmem:[%s356 + $0x30] sm:$0xf] %vm1326, %v1306
        %1340 = vst.msk [vmem:[%s356 + $0x34] sm:$0xf] %vm1326, %v1307
        %1341 = vst.msk [vmem:[%s356 + $0x38] sm:$0xf] %vm1326, %v1308
        %1342 = vst.msk [vmem:[%s356 + $0x3c] sm:$0xf] %vm1326, %v1309
      $region56: #{cnn_encode_layer.2} parent=47 // pred_fallthru
        _
      %s1343 = smul.u32 %s25, %s24
      %s1344 = smul.u32 16, %s1343
      %p1345 = scmp.lt.s32.totalorder %s1344, 15
      %s1346 = scalar_select %p1345, %s1344, 15
      %s1347 = smul.addr %s1346, 8
      %s1348 = scalar_lea.vmem %s7, %s1347
      %s1349 = smul.u32 %s25, %s24
      %s1350 = smul.u32 16, %s1349
      %p1351 = scmp.lt.s32.totalorder %s1350, 15
      %s1352 = scalar_select %p1351, %s1350, 15
      %s1353 = smul.addr %s1352, 4
      %s1354 = scalar_lea.vmem %s8, %s1353
      // Predicated region
      $region61: #{cnn_encode_layer.2} parent=47 // pred_check
        %p1355 = pneg %p208
      $region62: #{cnn_encode_layer.2} parent=47 // pred_check_branch
        %1357 = sbr.rel (%p1355) target = $region64
      $region63: #{cnn_encode_layer.2} parent=47 // pred_region
        %s1358 = smul.u32 %s25, %s24
        %s1359 = smul.u32 16, %s1358
      $region64: #{cnn_encode_layer.2} parent=47 // pred_fallthru
        _
      // Predicated region
      $region65: #{cnn_encode_layer.2} parent=47 // pred_check
        %p1360 = pneg %p236
      $region66: #{cnn_encode_layer.2} parent=47 // pred_check_branch
        %1362 = sbr.rel (%p1360) target = $region68
      $region67: #{cnn_encode_layer.2} parent=47 // pred_region
        %s1363 = smul.u32 %s25, %s24
        %s1364 = smul.u32 16, %s1363
      $region68: #{cnn_encode_layer.2} parent=47 // pred_fallthru
        _
    $region48: #{cnn_encode_layer.2} parent=5 // pred_fallthru
      _
    %p1365 = scmp.le.s32.totalorder 2, %s15
    // Predicated region
    $region69: #{cnn_encode_layer.2} parent=5 // pred_check
      %p1366 = pneg %p1365
    $region70: #{cnn_encode_layer.2} parent=5 // pred_check_branch
      %1368 = sbr.rel (%p1366) target = $region72
    $region71: #{cnn_encode_layer.2} parent=5 // pred_region
      %s1369 = ssub.s32 %s15, 2
      // Predicated region
      $region73: #{cnn_encode_layer.2} parent=71 // pred_check
        %p1370 = pneg %p214
      $region74: #{cnn_encode_layer.2} parent=71 // pred_check_branch
        %1372 = sbr.rel (%p1370) target = $region76
      $region75: #{cnn_encode_layer.2} parent=71 // pred_region
        %s1373 = smul.u32 %s27, %s26
        %s1374 = smul.u32 16, %s1373
        %p1375 = scmp.lt.s32.totalorder %s1374, 15
        %s1376 = scalar_select %p1375, %s1374, 15
        %s1377 = smul.addr %s1376, 8
        %s1378 = scalar_lea.vmem %s7, %s1377
      $region76: #{cnn_encode_layer.2} parent=71 // pred_fallthru
        _
      // Predicated region
      $region77: #{cnn_encode_layer.2} parent=71 // pred_check
        %p1379 = pneg %p242
      $region78: #{cnn_encode_layer.2} parent=71 // pred_check_branch
        %1381 = sbr.rel (%p1379) target = $region80
      $region79: #{cnn_encode_layer.2} parent=71 // pred_region
        %s1382 = smul.u32 %s27, %s26
        %s1383 = smul.u32 16, %s1382
        %p1384 = scmp.lt.s32.totalorder %s1383, 15
        %s1385 = scalar_select %p1384, %s1383, 15
        %s1386 = smul.addr %s1385, 4
        %s1387 = scalar_lea.vmem %s8, %s1386
      $region80: #{cnn_encode_layer.2} parent=71 // pred_fallthru
        _
    $region72: #{cnn_encode_layer.2} parent=5 // pred_fallthru
      _
  $region6: #{cnn_encode_layer.2} parent=0 // loop_footer
    %s19 = sadd.s32 1, %s15
  $region7: #{cnn_encode_layer.2} parent=0 // loop_footer_branch
    %14 = sbr.rel target = $region3
  $region8: #{cnn_encode_layer.2} parent=0 // loop_exit
    _

</llo_original>
